<compile_context>
chip_gen: v7x
topology: tpu7x:2x2x1
jax: 0.10.0
libtpu: 0.0.40
codegen_flags: <defaults>
</compile_context>

<pallas_src>
import functools

import jax
import jax.numpy as jnp
from jax.experimental import pallas as pl
from jax.experimental.pallas import tpu as pltpu


# ---------------------------------------------------------------------------
# Kernels
# ---------------------------------------------------------------------------

def _resident_kernel(n_layers, hid_p, true_dim, eps,
                     x_ref, normw_ref, w13_ref, w2_ref, outw_ref, outb_ref,
                     o_ref):
    """Whole decoder for one batch tile; all L layers' weights resident in
    VMEM.  grid = (batch_tiles,)."""
    h = x_ref[...].astype(jnp.float32)                       # (bm, dim_p) f32
    inv_dim = 1.0 / float(true_dim)

    for l in range(n_layers):                                # static unroll
        # RMSNorm (f32 stats; padded lanes of h are exactly zero, so summing
        # over dim_p and dividing by the true dim matches the reference).
        nw = normw_ref[l]                                    # (1, dim_p)
        ms = jnp.sum(h * h, axis=-1, keepdims=True) * inv_dim
        normed = h * jax.lax.rsqrt(ms + eps) * nw            # (bm, dim_p)

        # SwiGLU feed-forward: fused gate/up projection, bf16 in -> f32 acc.
        nb = normed.astype(jnp.bfloat16)
        ab = jnp.dot(nb, w13_ref[l],
                     preferred_element_type=jnp.float32)     # (bm, 2*hid_p)
        a = ab[:, :hid_p]                                    # w1 branch
        b = ab[:, hid_p:]                                    # w3 branch
        g = a * jax.nn.sigmoid(a)                            # SiLU (f32)
        ff = jnp.dot((g * b).astype(jnp.bfloat16), w2_ref[l],
                     preferred_element_type=jnp.float32)     # (bm, dim_p)
        h = h + ff                                           # residual

    out = jnp.dot(h.astype(jnp.bfloat16), outw_ref[...],
                  preferred_element_type=jnp.float32) + outb_ref[...]
    o_ref[...] = out.astype(o_ref.dtype)                     # (bm, out_p)


def _streaming_kernel(n_layers, hid_p, true_dim, eps,
                      x_ref, normw_ref, w13_ref, w2_ref, outw_ref, outb_ref,
                      o_ref, h_ref):
    """One (batch tile, layer) grid step; only one layer's weights resident
    (double-buffered).  grid = (batch_tiles, n_layers); h_ref carries the
    residual stream across the layer axis."""
    l = pl.program_id(1)

    @pl.when(l == 0)
    def _():
        h_ref[...] = x_ref[...].astype(jnp.float32)

    h = h_ref[...]                                           # (bm, dim_p) f32
    nw = normw_ref[0]                                        # (1, dim_p)
    ms = jnp.sum(h * h, axis=-1, keepdims=True) * (1.0 / float(true_dim))
    normed = h * jax.lax.rsqrt(ms + eps) * nw

    nb = normed.astype(jnp.bfloat16)
    ab = jnp.dot(nb, w13_ref[0], preferred_element_type=jnp.float32)
    a = ab[:, :hid_p]
    b = ab[:, hid_p:]
    g = a * jax.nn.sigmoid(a)
    ff = jnp.dot((g * b).astype(jnp.bfloat16), w2_ref[0],
                 preferred_element_type=jnp.float32)
    h_ref[...] = h + ff

    @pl.when(l == n_layers - 1)
    def _():
        out = jnp.dot(h_ref[...].astype(jnp.bfloat16), outw_ref[...],
                      preferred_element_type=jnp.float32) + outb_ref[...]
        o_ref[...] = out.astype(o_ref.dtype)


# ---------------------------------------------------------------------------
# Helpers
# ---------------------------------------------------------------------------

def _round_up(n, m):
    return ((n + m - 1) // m) * m


def _num_tensorcores():
    """Best-effort detection of TensorCores per device (v7x = 2).  Falls back
    to 1 (single-TC behavior is always safe)."""
    try:
        info = pltpu.get_tpu_info()
        for name in ("num_cores", "core_count", "num_tensorcores",
                     "tensorcore_count"):
            v = getattr(info, name, None)
            if v is not None:
                v = int(v)
                if v >= 1:
                    return v
    except Exception:
        pass
    try:
        v = getattr(jax.devices()[0], "num_cores", None)
        if v is not None and int(v) >= 1:
            return int(v)
    except Exception:
        pass
    return 1


def _vmem_cap_bytes():
    """Generation-aware VMEM cap (fallback 48 MiB fits v7x's 64 MiB)."""
    try:
        cap = getattr(pltpu.get_tpu_info(), "vmem_capacity_bytes", None)
        if cap:
            return int(cap) * 3 // 4
    except Exception:
        pass
    return 48 << 20


def _pick_block_m(batch, n_tc, cap=256):
    """Batch tile: fill the MXU M dimension (up to 256 rows), but on
    multi-TC chips give every TensorCore at least one batch tile."""
    bm = min(cap, _round_up(batch, 8))
    if n_tc > 1:
        per_core = max(8, _round_up(pl.cdiv(batch, n_tc), 8))
        bm = min(bm, per_core)
    return bm


def pack_params(params, *, lane=128):
    """One-time weight packing (do this at model-load time, NOT per call):
    fuse w1||w3, cast matmul weights to bf16, pad every feature dim to a
    128-lane multiple with zeros."""
    normw, w1, w3, w2, outw, outb = params
    L, dim, hidden = w1.shape
    out_dim = outw.shape[1]
    dim_p = _round_up(dim, lane)
    hid_p = _round_up(hidden, lane)
    out_p = _round_up(out_dim, lane)

    def pad(a, shape):
        return (jnp.zeros(shape, a.dtype)
                .at[tuple(slice(0, s) for s in a.shape)].set(a))

    w13 = jnp.concatenate([pad(w1, (L, dim_p, hid_p)),
                           pad(w3, (L, dim_p, hid_p))],
                          axis=-1).astype(jnp.bfloat16)       # (L, dim_p, 2*hid_p)
    w2p = pad(w2, (L, hid_p, dim_p)).astype(jnp.bfloat16)     # (L, hid_p, dim_p)
    outwp = pad(outw, (dim_p, out_p)).astype(jnp.bfloat16)    # (dim_p, out_p)
    outbp = pad(outb.reshape(1, -1), (1, out_p)).astype(jnp.float32)
    normwp = pad(normw.reshape(L, 1, dim), (L, 1, dim_p)).astype(jnp.float32)

    meta = dict(n_layers=L, dim=dim, hidden=hidden, out_dim=out_dim,
                dim_p=dim_p, hid_p=hid_p, out_p=out_p)
    return (normwp, w13, w2p, outwp, outbp), meta


# ---------------------------------------------------------------------------
# Forward wrapper
# ---------------------------------------------------------------------------

def tabular_decoder(x, packed, meta, *, block_m=None, eps=1e-5,
                    resident_weight_limit=8 << 20):
    normwp, w13, w2p, outwp, outbp = packed
    L = meta["n_layers"]
    dim, out_dim = meta["dim"], meta["out_dim"]
    dim_p, hid_p, out_p = meta["dim_p"], meta["hid_p"], meta["out_p"]

    B = x.shape[0]
    assert x.shape[1] == dim

    n_tc = _num_tensorcores()
    if block_m is None:
        block_m = _pick_block_m(B, n_tc)
    B_pad = _round_up(B, block_m)
    n_tiles = B_pad // block_m

    # Zero-pad batch rows and feature lanes.  Padded lanes stay exactly zero
    # through the whole network (zero weight rows/cols), padded rows produce
    # finite garbage-free zeros (rsqrt(eps) * 0), both are sliced off below.
    if (B_pad, dim_p) != (B, dim):
        x_p = jnp.zeros((B_pad, dim_p), x.dtype).at[:B, :dim].set(x)
    else:
        x_p = x

    weight_bytes = sum(int(a.size) * a.dtype.itemsize
                       for a in (normwp, w13, w2p, outwp, outbp))
    use_resident = weight_bytes <= resident_weight_limit
    x_bytes = x.dtype.itemsize
    cap = _vmem_cap_bytes()
    bf16_b, f32_b = 2, 4

    if use_resident:
        kernel = functools.partial(_resident_kernel, L, hid_p, dim, eps)
        grid = (n_tiles,)
        in_specs = [
            # batch-tiled input
            pl.BlockSpec((block_m, dim_p), lambda i: (i, 0)),
            # all weights resident, constant index -> single-buffered
            pl.BlockSpec((L, 1, dim_p), lambda i: (0, 0, 0),
                         pipeline_mode=pl.Buffered(1)),
            pl.BlockSpec((L, dim_p, 2 * hid_p), lambda i: (0, 0, 0),
                         pipeline_mode=pl.Buffered(1)),
            pl.BlockSpec((L, hid_p, dim_p), lambda i: (0, 0, 0),
                         pipeline_mode=pl.Buffered(1)),
            pl.BlockSpec((dim_p, out_p), lambda i: (0, 0),
                         pipeline_mode=pl.Buffered(1)),
            pl.BlockSpec((1, out_p), lambda i: (0, 0),
                         pipeline_mode=pl.Buffered(1)),
        ]
        out_specs = pl.BlockSpec((block_m, out_p), lambda i: (i, 0))
        scratch_shapes = []
        dims = ("parallel",)
        need = (weight_bytes
                + 2 * block_m * dim_p * x_bytes      # double-buffered x tile
                + 2 * block_m * out_p * x_bytes)     # double-buffered out tile
    else:
        kernel = functools.partial(_streaming_kernel, L, hid_p, dim, eps)
        grid = (n_tiles, L)
        in_specs = [
            pl.BlockSpec((block_m, dim_p), lambda i, l: (i, 0)),
            # per-layer streamed weights (double-buffered: next layer's DMA
            # hides behind this layer's matmuls)
            pl.BlockSpec((1, 1, dim_p), lambda i, l: (l, 0, 0)),
            pl.BlockSpec((1, dim_p, 2 * hid_p), lambda i, l: (l, 0, 0)),
            pl.BlockSpec((1, hid_p, dim_p), lambda i, l: (l, 0, 0)),
            # output projection: constant index -> single-buffered
            pl.BlockSpec((dim_p, out_p), lambda i, l: (0, 0),
                         pipeline_mode=pl.Buffered(1)),
            pl.BlockSpec((1, out_p), lambda i, l: (0, 0),
                         pipeline_mode=pl.Buffered(1)),
        ]
        out_specs = pl.BlockSpec((block_m, out_p), lambda i, l: (i, 0))
        scratch_shapes = [pltpu.VMEM((block_m, dim_p), jnp.float32)]
        dims = ("parallel", "arbitrary")
        per_layer_w = (dim_p * 2 * hid_p + hid_p * dim_p) * bf16_b + dim_p * f32_b
        need = (2 * per_layer_w                               # double-buffered layer
                + dim_p * out_p * bf16_b + out_p * f32_b      # out proj (single)
                + 2 * block_m * (dim_p + out_p) * x_bytes     # x / out tiles
                + block_m * dim_p * f32_b)                    # residual scratch

    vmem_limit = int(min(max(need + (8 << 20), 32 << 20), cap))

    out_padded = pl.pallas_call(
        kernel,
        out_shape=jax.ShapeDtypeStruct((B_pad, out_p), x.dtype),
        grid=grid,
        in_specs=in_specs,
        out_specs=out_specs,
        scratch_shapes=scratch_shapes,
        compiler_params=pltpu.CompilerParams(
            dimension_semantics=dims,
            vmem_limit_bytes=vmem_limit),
    )(x_p, normwp, w13, w2p, outwp, outbp)

    return out_padded[:B, :out_dim]


# ---------------------------------------------------------------------------
# References & init
# ---------------------------------------------------------------------------

def reference_forward_f32(x, params, eps=1e-5):
    """Pure-JAX f32 mirror of the PyTorch module."""
    normw, w1, w3, w2, outw, outb = params
    h = x.astype(jnp.float32)
    for l in range(w1.shape[0]):
        ms = jnp.mean(h * h, axis=-1, keepdims=True)
        normed = h * jax.lax.rsqrt(ms + eps) * normw[l]
        a = normed @ w1[l]
        g = a * jax.nn.sigmoid(a)
        b = normed @ w3[l]
        h = h + (g * b) @ w2[l]
    return h @ outw + outb


def reference_forward_bf16(x, params, eps=1e-5):
    """Mirror of the kernel's numerics: bf16 MXU operands, f32 accumulation."""
    normw, w1, w3, w2, outw, outb = params
    f32, bf16 = jnp.float32, jnp.bfloat16
    h = x.astype(f32)
    for l in range(w1.shape[0]):
        ms = jnp.mean(h * h, axis=-1, keepdims=True)
        normed = h * jax.lax.rsqrt(ms + eps) * normw[l]
        nb = normed.astype(bf16)
        a = jnp.dot(nb, w1[l].astype(bf16), preferred_element_type=f32)
        b = jnp.dot(nb, w3[l].astype(bf16), preferred_element_type=f32)
        g = a * jax.nn.sigmoid(a)
        h = h + jnp.dot((g * b).astype(bf16), w2[l].astype(bf16),
                        preferred_element_type=f32)
    out = jnp.dot(h.astype(bf16), outw.astype(bf16), preferred_element_type=f32)
    return out + outb


def init_params(key, dim, n_layers, out_dim):
    hidden = int(2 * dim / 3)   # matches FeedForward(dim, hidden_dim=dim)
    k1, k2, k3, k4, k5 = jax.random.split(key, 5)
    scale = 0.05
    normw = jnp.ones((n_layers, 1, dim), jnp.float32)   # RMSNorm init = ones
    w1 = scale * jax.random.normal(k1, (n_layers, dim, hidden), jnp.float32)
    w3 = scale * jax.random.normal(k2, (n_layers, dim, hidden), jnp.float32)
    w2 = scale * jax.random.normal(k3, (n_layers, hidden, dim), jnp.float32)
    outw = scale * jax.random.normal(k4, (dim, out_dim), jnp.float32)
    outb = scale * jax.random.normal(k5, (1, out_dim), jnp.float32)
    return normw, w1, w3, w2, outw, outb


if __name__ == "__main__":
    batch, dim, n_layers, out_dim = 128, 192, 3, 32   # hidden = 128
    key = jax.random.PRNGKey(0)
    kx, kp = jax.random.split(key)
    x = jax.random.normal(kx, (batch, dim), jnp.float32)
    params = init_params(kp, dim, n_layers, out_dim)

    # One-time weight packing (hoisted out of the forward call path).
    packed, meta = pack_params(params)

    fwd = jax.jit(lambda xi, p: tabular_decoder(xi, p, meta))
    out = jax.block_until_ready(fwd(x, packed))
    assert out.shape == (batch, out_dim)

    # Tight check against a reference with the same bf16 MXU operands ...
    ref_bf16 = reference_forward_bf16(x, params)
    assert jnp.allclose(out, ref_bf16, atol=5e-3, rtol=5e-3), \
        "mismatch vs bf16 reference"
    # ... and a loose check against the full-f32 module semantics.
    ref_f32 = reference_forward_f32(x, params)
    assert jnp.allclose(out, ref_f32, atol=1e-1, rtol=1e-1), \
        "mismatch vs f32 reference"

    print("KERNEL_OK")
</pallas_src>

<mosaic_0001>
module attributes {stable_mosaic.version = 11 : i64} {
  func.func @_resident_kernel(%arg0: i32, %arg1: memref<128x256xf32, #tpu.memory_space<vmem>>, %arg2: memref<3x1x256xf32, #tpu.memory_space<vmem>>, %arg3: memref<3x256x256xbf16, #tpu.memory_space<vmem>>, %arg4: memref<3x128x256xbf16, #tpu.memory_space<vmem>>, %arg5: memref<256x128xbf16, #tpu.memory_space<vmem>>, %arg6: memref<1x128xf32, #tpu.memory_space<vmem>>, %arg7: memref<128x128xf32, #tpu.memory_space<vmem>>) attributes {dimension_semantics = [#tpu.dimension_semantics<parallel>], iteration_bounds = array<i64: 1>, scalar_prefetch = 0 : i64, scratch_operands = 0 : i64, tpu.core_type = #tpu.core_type<tc>, window_params = [{transform_indices = @transform_0, window_bounds = array<i64: 128, 256>}, {pipeline_mode = #tpu.pipeline_mode<synchronous>, transform_indices = @transform_1, window_bounds = array<i64: 3, 1, 256>}, {pipeline_mode = #tpu.pipeline_mode<synchronous>, transform_indices = @transform_2, window_bounds = array<i64: 3, 256, 256>}, {pipeline_mode = #tpu.pipeline_mode<synchronous>, transform_indices = @transform_3, window_bounds = array<i64: 3, 128, 256>}, {pipeline_mode = #tpu.pipeline_mode<synchronous>, transform_indices = @transform_4, window_bounds = array<i64: 256, 128>}, {pipeline_mode = #tpu.pipeline_mode<synchronous>, transform_indices = @transform_5, window_bounds = array<i64: 1, 128>}, {transform_indices = @transform_6, window_bounds = array<i64: 128, 128>}]} {
    %c0 = arith.constant 0 : index
    %c0_0 = arith.constant 0 : index
    %0 = vector.load %arg1[%c0, %c0_0] : memref<128x256xf32, #tpu.memory_space<vmem>>, vector<128x256xf32>
    %c0_1 = arith.constant 0 : index
    %c0_2 = arith.constant 0 : index
    %c0_3 = arith.constant 0 : index
    %1 = vector.load %arg2[%c0_1, %c0_2, %c0_3] : memref<3x1x256xf32, #tpu.memory_space<vmem>>, vector<1x1x256xf32>
    %2 = vector.shape_cast %1 : vector<1x1x256xf32> to vector<1x256xf32>
    %3 = arith.mulf %0, %0 : vector<128x256xf32>
    %cst = arith.constant dense<0.000000e+00> : vector<128xf32>
    %4 = vector.multi_reduction <add>, %3, %cst [1] : vector<128x256xf32> to vector<128xf32>
    %5 = vector.shape_cast %4 : vector<128xf32> to vector<128x1xf32>
    %cst_4 = arith.constant 0.00520833349 : f32
    %6 = vector.broadcast %cst_4 : f32 to vector<128x1xf32>
    %7 = arith.mulf %5, %6 : vector<128x1xf32>
    %cst_5 = arith.constant 9.99999974E-6 : f32
    %8 = vector.broadcast %cst_5 : f32 to vector<128x1xf32>
    %9 = arith.addf %7, %8 : vector<128x1xf32>
    %10 = math.rsqrt %9 : vector<128x1xf32>
    %11 = vector.broadcast %10 : vector<128x1xf32> to vector<128x256xf32>
    %12 = arith.mulf %0, %11 : vector<128x256xf32>
    %13 = vector.broadcast %2 : vector<1x256xf32> to vector<128x256xf32>
    %14 = arith.mulf %12, %13 : vector<128x256xf32>
    %15 = arith.truncf %14 : vector<128x256xf32> to vector<128x256xbf16>
    %c0_6 = arith.constant 0 : index
    %c0_7 = arith.constant 0 : index
    %c0_8 = arith.constant 0 : index
    %16 = vector.load %arg3[%c0_6, %c0_7, %c0_8] : memref<3x256x256xbf16, #tpu.memory_space<vmem>>, vector<1x256x256xbf16>
    %17 = vector.shape_cast %16 : vector<1x256x256xbf16> to vector<256x256xbf16>
    %cst_9 = arith.constant dense<0.000000e+00> : vector<128x256xf32>
    %18 = tpu.matmul %15, %17, %cst_9 {dimension_numbers = #tpu.dot_dimension_numbers<[1], [0], [0], [1], [0, 0, 1, 1], [], []>} : vector<128x256xbf16>, vector<256x256xbf16>, vector<128x256xf32> -> vector<128x256xf32>
    %19 = vector.extract_strided_slice %18 {offsets = [0, 0], sizes = [128, 128], strides = [1, 1]} : vector<128x256xf32> to vector<128x128xf32>
    %20 = vector.extract_strided_slice %18 {offsets = [0, 128], sizes = [128, 128], strides = [1, 1]} : vector<128x256xf32> to vector<128x128xf32>
    %21 = arith.negf %19 : vector<128x128xf32>
    %22 = math.exp %21 : vector<128x128xf32>
    %cst_10 = arith.constant 1.000000e+00 : f32
    %23 = vector.broadcast %cst_10 : f32 to vector<128x128xf32>
    %24 = arith.addf %23, %22 : vector<128x128xf32>
    %25 = arith.divf %23, %24 : vector<128x128xf32>
    %26 = arith.mulf %19, %25 : vector<128x128xf32>
    %27 = arith.mulf %26, %20 : vector<128x128xf32>
    %28 = arith.truncf %27 : vector<128x128xf32> to vector<128x128xbf16>
    %c0_11 = arith.constant 0 : index
    %c0_12 = arith.constant 0 : index
    %c0_13 = arith.constant 0 : index
    %29 = vector.load %arg4[%c0_11, %c0_12, %c0_13] : memref<3x128x256xbf16, #tpu.memory_space<vmem>>, vector<1x128x256xbf16>
    %30 = vector.shape_cast %29 : vector<1x128x256xbf16> to vector<128x256xbf16>
    %cst_14 = arith.constant dense<0.000000e+00> : vector<128x256xf32>
    %31 = tpu.matmul %28, %30, %cst_14 {dimension_numbers = #tpu.dot_dimension_numbers<[1], [0], [0], [1], [0, 0, 1, 1], [], []>} : vector<128x128xbf16>, vector<128x256xbf16>, vector<128x256xf32> -> vector<128x256xf32>
    %32 = arith.addf %0, %31 : vector<128x256xf32>
    %c1 = arith.constant 1 : index
    %c0_15 = arith.constant 0 : index
    %c0_16 = arith.constant 0 : index
    %33 = vector.load %arg2[%c1, %c0_15, %c0_16] : memref<3x1x256xf32, #tpu.memory_space<vmem>>, vector<1x1x256xf32>
    %34 = vector.shape_cast %33 : vector<1x1x256xf32> to vector<1x256xf32>
    %35 = arith.mulf %32, %32 : vector<128x256xf32>
    %cst_17 = arith.constant dense<0.000000e+00> : vector<128xf32>
    %36 = vector.multi_reduction <add>, %35, %cst_17 [1] : vector<128x256xf32> to vector<128xf32>
    %37 = vector.shape_cast %36 : vector<128xf32> to vector<128x1xf32>
    %cst_18 = arith.constant 0.00520833349 : f32
    %38 = vector.broadcast %cst_18 : f32 to vector<128x1xf32>
    %39 = arith.mulf %37, %38 : vector<128x1xf32>
    %cst_19 = arith.constant 9.99999974E-6 : f32
    %40 = vector.broadcast %cst_19 : f32 to vector<128x1xf32>
    %41 = arith.addf %39, %40 : vector<128x1xf32>
    %42 = math.rsqrt %41 : vector<128x1xf32>
    %43 = vector.broadcast %42 : vector<128x1xf32> to vector<128x256xf32>
    %44 = arith.mulf %32, %43 : vector<128x256xf32>
    %45 = vector.broadcast %34 : vector<1x256xf32> to vector<128x256xf32>
    %46 = arith.mulf %44, %45 : vector<128x256xf32>
    %47 = arith.truncf %46 : vector<128x256xf32> to vector<128x256xbf16>
    %c1_20 = arith.constant 1 : index
    %c0_21 = arith.constant 0 : index
    %c0_22 = arith.constant 0 : index
    %48 = vector.load %arg3[%c1_20, %c0_21, %c0_22] : memref<3x256x256xbf16, #tpu.memory_space<vmem>>, vector<1x256x256xbf16>
    %49 = vector.shape_cast %48 : vector<1x256x256xbf16> to vector<256x256xbf16>
    %cst_23 = arith.constant dense<0.000000e+00> : vector<128x256xf32>
    %50 = tpu.matmul %47, %49, %cst_23 {dimension_numbers = #tpu.dot_dimension_numbers<[1], [0], [0], [1], [0, 0, 1, 1], [], []>} : vector<128x256xbf16>, vector<256x256xbf16>, vector<128x256xf32> -> vector<128x256xf32>
    %51 = vector.extract_strided_slice %50 {offsets = [0, 0], sizes = [128, 128], strides = [1, 1]} : vector<128x256xf32> to vector<128x128xf32>
    %52 = vector.extract_strided_slice %50 {offsets = [0, 128], sizes = [128, 128], strides = [1, 1]} : vector<128x256xf32> to vector<128x128xf32>
    %53 = arith.negf %51 : vector<128x128xf32>
    %54 = math.exp %53 : vector<128x128xf32>
    %cst_24 = arith.constant 1.000000e+00 : f32
    %55 = vector.broadcast %cst_24 : f32 to vector<128x128xf32>
    %56 = arith.addf %55, %54 : vector<128x128xf32>
    %57 = arith.divf %55, %56 : vector<128x128xf32>
    %58 = arith.mulf %51, %57 : vector<128x128xf32>
    %59 = arith.mulf %58, %52 : vector<128x128xf32>
    %60 = arith.truncf %59 : vector<128x128xf32> to vector<128x128xbf16>
    %c1_25 = arith.constant 1 : index
    %c0_26 = arith.constant 0 : index
    %c0_27 = arith.constant 0 : index
    %61 = vector.load %arg4[%c1_25, %c0_26, %c0_27] : memref<3x128x256xbf16, #tpu.memory_space<vmem>>, vector<1x128x256xbf16>
    %62 = vector.shape_cast %61 : vector<1x128x256xbf16> to vector<128x256xbf16>
    %cst_28 = arith.constant dense<0.000000e+00> : vector<128x256xf32>
    %63 = tpu.matmul %60, %62, %cst_28 {dimension_numbers = #tpu.dot_dimension_numbers<[1], [0], [0], [1], [0, 0, 1, 1], [], []>} : vector<128x128xbf16>, vector<128x256xbf16>, vector<128x256xf32> -> vector<128x256xf32>
    %64 = arith.addf %32, %63 : vector<128x256xf32>
    %c2 = arith.constant 2 : index
    %c0_29 = arith.constant 0 : index
    %c0_30 = arith.constant 0 : index
    %65 = vector.load %arg2[%c2, %c0_29, %c0_30] : memref<3x1x256xf32, #tpu.memory_space<vmem>>, vector<1x1x256xf32>
    %66 = vector.shape_cast %65 : vector<1x1x256xf32> to vector<1x256xf32>
    %67 = arith.mulf %64, %64 : vector<128x256xf32>
    %cst_31 = arith.constant dense<0.000000e+00> : vector<128xf32>
    %68 = vector.multi_reduction <add>, %67, %cst_31 [1] : vector<128x256xf32> to vector<128xf32>
    %69 = vector.shape_cast %68 : vector<128xf32> to vector<128x1xf32>
    %cst_32 = arith.constant 0.00520833349 : f32
    %70 = vector.broadcast %cst_32 : f32 to vector<128x1xf32>
    %71 = arith.mulf %69, %70 : vector<128x1xf32>
    %cst_33 = arith.constant 9.99999974E-6 : f32
    %72 = vector.broadcast %cst_33 : f32 to vector<128x1xf32>
    %73 = arith.addf %71, %72 : vector<128x1xf32>
    %74 = math.rsqrt %73 : vector<128x1xf32>
    %75 = vector.broadcast %74 : vector<128x1xf32> to vector<128x256xf32>
    %76 = arith.mulf %64, %75 : vector<128x256xf32>
    %77 = vector.broadcast %66 : vector<1x256xf32> to vector<128x256xf32>
    %78 = arith.mulf %76, %77 : vector<128x256xf32>
    %79 = arith.truncf %78 : vector<128x256xf32> to vector<128x256xbf16>
    %c2_34 = arith.constant 2 : index
    %c0_35 = arith.constant 0 : index
    %c0_36 = arith.constant 0 : index
    %80 = vector.load %arg3[%c2_34, %c0_35, %c0_36] : memref<3x256x256xbf16, #tpu.memory_space<vmem>>, vector<1x256x256xbf16>
    %81 = vector.shape_cast %80 : vector<1x256x256xbf16> to vector<256x256xbf16>
    %cst_37 = arith.constant dense<0.000000e+00> : vector<128x256xf32>
    %82 = tpu.matmul %79, %81, %cst_37 {dimension_numbers = #tpu.dot_dimension_numbers<[1], [0], [0], [1], [0, 0, 1, 1], [], []>} : vector<128x256xbf16>, vector<256x256xbf16>, vector<128x256xf32> -> vector<128x256xf32>
    %83 = vector.extract_strided_slice %82 {offsets = [0, 0], sizes = [128, 128], strides = [1, 1]} : vector<128x256xf32> to vector<128x128xf32>
    %84 = vector.extract_strided_slice %82 {offsets = [0, 128], sizes = [128, 128], strides = [1, 1]} : vector<128x256xf32> to vector<128x128xf32>
    %85 = arith.negf %83 : vector<128x128xf32>
    %86 = math.exp %85 : vector<128x128xf32>
    %cst_38 = arith.constant 1.000000e+00 : f32
    %87 = vector.broadcast %cst_38 : f32 to vector<128x128xf32>
    %88 = arith.addf %87, %86 : vector<128x128xf32>
    %89 = arith.divf %87, %88 : vector<128x128xf32>
    %90 = arith.mulf %83, %89 : vector<128x128xf32>
    %91 = arith.mulf %90, %84 : vector<128x128xf32>
    %92 = arith.truncf %91 : vector<128x128xf32> to vector<128x128xbf16>
    %c2_39 = arith.constant 2 : index
    %c0_40 = arith.constant 0 : index
    %c0_41 = arith.constant 0 : index
    %93 = vector.load %arg4[%c2_39, %c0_40, %c0_41] : memref<3x128x256xbf16, #tpu.memory_space<vmem>>, vector<1x128x256xbf16>
    %94 = vector.shape_cast %93 : vector<1x128x256xbf16> to vector<128x256xbf16>
    %cst_42 = arith.constant dense<0.000000e+00> : vector<128x256xf32>
    %95 = tpu.matmul %92, %94, %cst_42 {dimension_numbers = #tpu.dot_dimension_numbers<[1], [0], [0], [1], [0, 0, 1, 1], [], []>} : vector<128x128xbf16>, vector<128x256xbf16>, vector<128x256xf32> -> vector<128x256xf32>
    %96 = arith.addf %64, %95 : vector<128x256xf32>
    %97 = arith.truncf %96 : vector<128x256xf32> to vector<128x256xbf16>
    %c0_43 = arith.constant 0 : index
    %c0_44 = arith.constant 0 : index
    %98 = vector.load %arg5[%c0_43, %c0_44] : memref<256x128xbf16, #tpu.memory_space<vmem>>, vector<256x128xbf16>
    %cst_45 = arith.constant dense<0.000000e+00> : vector<128x128xf32>
    %99 = tpu.matmul %97, %98, %cst_45 {dimension_numbers = #tpu.dot_dimension_numbers<[1], [0], [0], [1], [0, 0, 1, 1], [], []>} : vector<128x256xbf16>, vector<256x128xbf16>, vector<128x128xf32> -> vector<128x128xf32>
    %c0_46 = arith.constant 0 : index
    %c0_47 = arith.constant 0 : index
    %100 = vector.load %arg6[%c0_46, %c0_47] : memref<1x128xf32, #tpu.memory_space<vmem>>, vector<1x128xf32>
    %101 = vector.broadcast %100 : vector<1x128xf32> to vector<128x128xf32>
    %102 = arith.addf %99, %101 : vector<128x128xf32>
    %c0_48 = arith.constant 0 : index
    %c0_49 = arith.constant 0 : index
    %103 = vector.load %arg7[%c0_48, %c0_49] : memref<128x128xf32, #tpu.memory_space<vmem>>, vector<128x128xf32>
    tpu.vector_store %arg7[%c0_48, %c0_49], %102 {strides = array<i32>} : memref<128x128xf32, #tpu.memory_space<vmem>>, vector<128x128xf32>,
    return
  }
  func.func @transform_0(%arg0: i32) -> (i32, i32) {
    %c0_i32 = arith.constant 0 : i32
    %c0_i32_0 = arith.constant 0 : i32
    return %arg0, %c0_i32 : i32, i32
  }
  func.func @transform_1(%arg0: i32) -> (i32, i32, i32) {
    %c0_i32 = arith.constant 0 : i32
    %c0_i32_0 = arith.constant 0 : i32
    %c0_i32_1 = arith.constant 0 : i32
    %c0_i32_2 = arith.constant 0 : i32
    return %c0_i32, %c0_i32_0, %c0_i32_1 : i32, i32, i32
  }
  func.func @transform_2(%arg0: i32) -> (i32, i32, i32) {
    %c0_i32 = arith.constant 0 : i32
    %c0_i32_0 = arith.constant 0 : i32
    %c0_i32_1 = arith.constant 0 : i32
    %c0_i32_2 = arith.constant 0 : i32
    return %c0_i32, %c0_i32_0, %c0_i32_1 : i32, i32, i32
  }
  func.func @transform_3(%arg0: i32) -> (i32, i32, i32) {
    %c0_i32 = arith.constant 0 : i32
    %c0_i32_0 = arith.constant 0 : i32
    %c0_i32_1 = arith.constant 0 : i32
    %c0_i32_2 = arith.constant 0 : i32
    return %c0_i32, %c0_i32_0, %c0_i32_1 : i32, i32, i32
  }
  func.func @transform_4(%arg0: i32) -> (i32, i32) {
    %c0_i32 = arith.constant 0 : i32
    %c0_i32_0 = arith.constant 0 : i32
    %c0_i32_1 = arith.constant 0 : i32
    return %c0_i32, %c0_i32_0 : i32, i32
  }
  func.func @transform_5(%arg0: i32) -> (i32, i32) {
    %c0_i32 = arith.constant 0 : i32
    %c0_i32_0 = arith.constant 0 : i32
    %c0_i32_1 = arith.constant 0 : i32
    return %c0_i32, %c0_i32_0 : i32, i32
  }
  func.func @transform_6(%arg0: i32) -> (i32, i32) {
    %c0_i32 = arith.constant 0 : i32
    %c0_i32_0 = arith.constant 0 : i32
    return %arg0, %c0_i32 : i32, i32
  }
}

</mosaic_0001>

<llo_original>
// kernel: _lambda_.1
$region0: #{_lambda_.1}
  #allocation0 [shape = 'u32[]', space=smem, size = 0x4, offset = 0x4, fixed_abs, tag = 'smem constant byte address 0x4 - core index']
  #allocation1 [shape = 'u32[144,128]{1,0:T(1,128)}', space=vmem, size = 0x12000, scoped, tag = 'internal scratch']
  %s0 = inlined_call_operand.vmem [shape: f32[128,256], index: 0, kind: input, shape index: {}]
  %s1 = inlined_call_operand.vmem [shape: f32[3,1,256], index: 1, kind: input, shape index: {}]
  %s2 = inlined_call_operand.vmem [shape: bf16[3,256,256], index: 2, kind: input, shape index: {}]
  %s3 = inlined_call_operand.vmem [shape: bf16[3,128,256], index: 3, kind: input, shape index: {}]
  %s4 = inlined_call_operand.vmem [shape: bf16[256,128], index: 4, kind: input, shape index: {}]
  %s5 = inlined_call_operand.vmem [shape: f32[1,128], index: 5, kind: input, shape index: {}]
  %s6 = inlined_call_operand.vmem [shape: f32[128,128], index: 6, kind: output, shape index: {}]
  %s7 = sld [smem:[#allocation0]]
  $region34: #{_lambda_.1} parent=0
    _
  %s9 = ssub.s32 1, %s7
  %s10 = scalar_select 0, %s9, %s7
  // Predicated region
  $region2: #{_lambda_.1} parent=0 // pred_check
    _
  $region3: #{_lambda_.1} parent=0 // pred_check_branch
    %12 = sbr.rel (0) target = $region5
  $region4: #{_lambda_.1} parent=0 // pred_region
    _
  $region5: #{_lambda_.1} parent=0 // pred_fallthru
    _
  // Predicated region
  $region6: #{_lambda_.1} parent=0 // pred_check
    _
  $region7: #{_lambda_.1} parent=0 // pred_check_branch
    %14 = sbr.rel (0) target = $region9
  $region8: #{_lambda_.1} parent=0 // pred_region
    _
  $region9: #{_lambda_.1} parent=0 // pred_fallthru
    _
  // Predicated region
  $region10: #{_lambda_.1} parent=0 // pred_check
    _
  $region11: #{_lambda_.1} parent=0 // pred_check_branch
    %16 = sbr.rel (0) target = $region13
  $region12: #{_lambda_.1} parent=0 // pred_region
    _
  $region13: #{_lambda_.1} parent=0 // pred_fallthru
    _
  // Predicated region
  $region14: #{_lambda_.1} parent=0 // pred_check
    _
  $region15: #{_lambda_.1} parent=0 // pred_check_branch
    %18 = sbr.rel (0) target = $region17
  $region16: #{_lambda_.1} parent=0 // pred_region
    _
  $region17: #{_lambda_.1} parent=0 // pred_fallthru
    _
  // Predicated region
  $region18: #{_lambda_.1} parent=0 // pred_check
    _
  $region19: #{_lambda_.1} parent=0 // pred_check_branch
    %20 = sbr.rel (0) target = $region21
  $region20: #{_lambda_.1} parent=0 // pred_region
    _
  $region21: #{_lambda_.1} parent=0 // pred_fallthru
    _
  // Predicated region
  $region22: #{_lambda_.1} parent=0 // pred_check
    _
  $region23: #{_lambda_.1} parent=0 // pred_check_branch
    %22 = sbr.rel (0) target = $region25
  $region24: #{_lambda_.1} parent=0 // pred_region
    _
  $region25: #{_lambda_.1} parent=0 // pred_fallthru
    _
  %v24 = vld [vmem:[%s0] sm:$0xff]
  %v25 = vld [vmem:[%s0 + $0x8] sm:$0xff]
  %v26 = vld [vmem:[%s0 + $0x10] sm:$0xff]
  %v27 = vld [vmem:[%s0 + $0x18] sm:$0xff]
  %v28 = vld [vmem:[%s0 + $0x20] sm:$0xff]
  %v29 = vld [vmem:[%s0 + $0x28] sm:$0xff]
  %v30 = vld [vmem:[%s0 + $0x30] sm:$0xff]
  %v31 = vld [vmem:[%s0 + $0x38] sm:$0xff]
  %v32 = vld [vmem:[%s0 + $0x40] sm:$0xff]
  %v33 = vld [vmem:[%s0 + $0x48] sm:$0xff]
  %v34 = vld [vmem:[%s0 + $0x50] sm:$0xff]
  %v35 = vld [vmem:[%s0 + $0x58] sm:$0xff]
  %v36 = vld [vmem:[%s0 + $0x60] sm:$0xff]
  %v37 = vld [vmem:[%s0 + $0x68] sm:$0xff]
  %v38 = vld [vmem:[%s0 + $0x70] sm:$0xff]
  %v39 = vld [vmem:[%s0 + $0x78] sm:$0xff]
  %v40 = vld [vmem:[%s0 + $0x80] sm:$0xff]
  %v41 = vld [vmem:[%s0 + $0x88] sm:$0xff]
  %v42 = vld [vmem:[%s0 + $0x90] sm:$0xff]
  %v43 = vld [vmem:[%s0 + $0x98] sm:$0xff]
  %v44 = vld [vmem:[%s0 + $0xa0] sm:$0xff]
  %v45 = vld [vmem:[%s0 + $0xa8] sm:$0xff]
  %v46 = vld [vmem:[%s0 + $0xb0] sm:$0xff]
  %v47 = vld [vmem:[%s0 + $0xb8] sm:$0xff]
  %v48 = vld [vmem:[%s0 + $0xc0] sm:$0xff]
  %v49 = vld [vmem:[%s0 + $0xc8] sm:$0xff]
  %v50 = vld [vmem:[%s0 + $0xd0] sm:$0xff]
  %v51 = vld [vmem:[%s0 + $0xd8] sm:$0xff]
  %v52 = vld [vmem:[%s0 + $0xe0] sm:$0xff]
  %v53 = vld [vmem:[%s0 + $0xe8] sm:$0xff]
  %v54 = vld [vmem:[%s0 + $0xf0] sm:$0xff]
  %v55 = vld [vmem:[%s0 + $0xf8] sm:$0xff]
  %v56 = vld [vmem:[%s1] sm:$0x3]
  %v57 = vmul.f32 %v24, %v24
  %v58 = vmul.f32 %v25, %v25
  %v59 = vmul.f32 %v26, %v26
  %v60 = vmul.f32 %v27, %v27
  %v61 = vmul.f32 %v28, %v28
  %v62 = vmul.f32 %v29, %v29
  %v63 = vmul.f32 %v30, %v30
  %v64 = vmul.f32 %v31, %v31
  %v65 = vmul.f32 %v32, %v32
  %v66 = vmul.f32 %v33, %v33
  %v67 = vmul.f32 %v34, %v34
  %v68 = vmul.f32 %v35, %v35
  %v69 = vmul.f32 %v36, %v36
  %v70 = vmul.f32 %v37, %v37
  %v71 = vmul.f32 %v38, %v38
  %v72 = vmul.f32 %v39, %v39
  %v73 = vmul.f32 %v40, %v40
  %v74 = vmul.f32 %v41, %v41
  %v75 = vmul.f32 %v42, %v42
  %v76 = vmul.f32 %v43, %v43
  %v77 = vmul.f32 %v44, %v44
  %v78 = vmul.f32 %v45, %v45
  %v79 = vmul.f32 %v46, %v46
  %v80 = vmul.f32 %v47, %v47
  %v81 = vmul.f32 %v48, %v48
  %v82 = vmul.f32 %v49, %v49
  %v83 = vmul.f32 %v50, %v50
  %v84 = vmul.f32 %v51, %v51
  %v85 = vmul.f32 %v52, %v52
  %v86 = vmul.f32 %v53, %v53
  %v87 = vmul.f32 %v54, %v54
  %v88 = vmul.f32 %v55, %v55
  %v89 = vadd.f32 %v57, %v58
  %90 = vadd.xlane.f32.xlu0 %v89
  %v91 = vpop.xlane.xlu0 %90
  %v92 = vadd.f32 %v59, %v60
  %93 = vadd.xlane.f32.xlu0 %v92
  %v94 = vpop.xlane.xlu0 %93
  %v95 = vadd.f32 %v61, %v62
  %96 = vadd.xlane.f32.xlu0 %v95
  %v97 = vpop.xlane.xlu0 %96
  %v98 = vadd.f32 %v63, %v64
  %99 = vadd.xlane.f32.xlu0 %v98
  %v100 = vpop.xlane.xlu0 %99
  %v101 = vadd.f32 %v65, %v66
  %102 = vadd.xlane.f32.xlu0 %v101
  %v103 = vpop.xlane.xlu0 %102
  %v104 = vadd.f32 %v67, %v68
  %105 = vadd.xlane.f32.xlu0 %v104
  %v106 = vpop.xlane.xlu0 %105
  %v107 = vadd.f32 %v69, %v70
  %108 = vadd.xlane.f32.xlu0 %v107
  %v109 = vpop.xlane.xlu0 %108
  %v110 = vadd.f32 %v71, %v72
  %111 = vadd.xlane.f32.xlu0 %v110
  %v112 = vpop.xlane.xlu0 %111
  %v113 = vadd.f32 %v73, %v74
  %114 = vadd.xlane.f32.xlu0 %v113
  %v115 = vpop.xlane.xlu0 %114
  %v116 = vadd.f32 %v75, %v76
  %117 = vadd.xlane.f32.xlu0 %v116
  %v118 = vpop.xlane.xlu0 %117
  %v119 = vadd.f32 %v77, %v78
  %120 = vadd.xlane.f32.xlu0 %v119
  %v121 = vpop.xlane.xlu0 %120
  %v122 = vadd.f32 %v79, %v80
  %123 = vadd.xlane.f32.xlu0 %v122
  %v124 = vpop.xlane.xlu0 %123
  %v125 = vadd.f32 %v81, %v82
  %126 = vadd.xlane.f32.xlu0 %v125
  %v127 = vpop.xlane.xlu0 %126
  %v128 = vadd.f32 %v83, %v84
  %129 = vadd.xlane.f32.xlu0 %v128
  %v130 = vpop.xlane.xlu0 %129
  %v131 = vadd.f32 %v85, %v86
  %132 = vadd.xlane.f32.xlu0 %v131
  %v133 = vpop.xlane.xlu0 %132
  %v134 = vadd.f32 %v87, %v88
  %135 = vadd.xlane.f32.xlu0 %v134
  %v136 = vpop.xlane.xlu0 %135
  %v137 = vmul.f32 %v91, 0.0052083335
  %v138 = vmul.f32 %v94, 0.0052083335
  %v139 = vmul.f32 %v97, 0.0052083335
  %v140 = vmul.f32 %v100, 0.0052083335
  %v141 = vmul.f32 %v103, 0.0052083335
  %v142 = vmul.f32 %v106, 0.0052083335
  %v143 = vmul.f32 %v109, 0.0052083335
  %v144 = vmul.f32 %v112, 0.0052083335
  %v145 = vmul.f32 %v115, 0.0052083335
  %v146 = vmul.f32 %v118, 0.0052083335
  %v147 = vmul.f32 %v121, 0.0052083335
  %v148 = vmul.f32 %v124, 0.0052083335
  %v149 = vmul.f32 %v127, 0.0052083335
  %v150 = vmul.f32 %v130, 0.0052083335
  %v151 = vmul.f32 %v133, 0.0052083335
  %v152 = vmul.f32 %v136, 0.0052083335
  %v153 = vadd.f32 %v137, 1e-05
  %v154 = vadd.f32 %v138, 1e-05
  %v155 = vadd.f32 %v139, 1e-05
  %v156 = vadd.f32 %v140, 1e-05
  %v157 = vadd.f32 %v141, 1e-05
  %v158 = vadd.f32 %v142, 1e-05
  %v159 = vadd.f32 %v143, 1e-05
  %v160 = vadd.f32 %v144, 1e-05
  %v161 = vadd.f32 %v145, 1e-05
  %v162 = vadd.f32 %v146, 1e-05
  %v163 = vadd.f32 %v147, 1e-05
  %v164 = vadd.f32 %v148, 1e-05
  %v165 = vadd.f32 %v149, 1e-05
  %v166 = vadd.f32 %v150, 1e-05
  %v167 = vadd.f32 %v151, 1e-05
  %v168 = vadd.f32 %v152, 1e-05
  %v169 = vrsqrt.pop %v153
  %v170 = vrsqrt.pop %v154
  %v171 = vrsqrt.pop %v155
  %v172 = vrsqrt.pop %v156
  %v173 = vrsqrt.pop %v157
  %v174 = vrsqrt.pop %v158
  %v175 = vrsqrt.pop %v159
  %v176 = vrsqrt.pop %v160
  %v177 = vrsqrt.pop %v161
  %v178 = vrsqrt.pop %v162
  %v179 = vrsqrt.pop %v163
  %v180 = vrsqrt.pop %v164
  %v181 = vrsqrt.pop %v165
  %v182 = vrsqrt.pop %v166
  %v183 = vrsqrt.pop %v167
  %v184 = vrsqrt.pop %v168
  %v185 = vmul.f32 %v24, %v169
  %v186 = vmul.f32 %v25, %v169
  %v187 = vmul.f32 %v26, %v170
  %v188 = vmul.f32 %v27, %v170
  %v189 = vmul.f32 %v28, %v171
  %v190 = vmul.f32 %v29, %v171
  %v191 = vmul.f32 %v30, %v172
  %v192 = vmul.f32 %v31, %v172
  %v193 = vmul.f32 %v32, %v173
  %v194 = vmul.f32 %v33, %v173
  %v195 = vmul.f32 %v34, %v174
  %v196 = vmul.f32 %v35, %v174
  %v197 = vmul.f32 %v36, %v175
  %v198 = vmul.f32 %v37, %v175
  %v199 = vmul.f32 %v38, %v176
  %v200 = vmul.f32 %v39, %v176
  %v201 = vmul.f32 %v40, %v177
  %v202 = vmul.f32 %v41, %v177
  %v203 = vmul.f32 %v42, %v178
  %v204 = vmul.f32 %v43, %v178
  %v205 = vmul.f32 %v44, %v179
  %v206 = vmul.f32 %v45, %v179
  %v207 = vmul.f32 %v46, %v180
  %v208 = vmul.f32 %v47, %v180
  %v209 = vmul.f32 %v48, %v181
  %v210 = vmul.f32 %v49, %v181
  %v211 = vmul.f32 %v50, %v182
  %v212 = vmul.f32 %v51, %v182
  %v213 = vmul.f32 %v52, %v183
  %v214 = vmul.f32 %v53, %v183
  %v215 = vmul.f32 %v54, %v184
  %v216 = vmul.f32 %v55, %v184
  %v218 = vlaneseq
  %v219 = vshrl.u32 %v218, 7
  %v220 = vsub.s32 0, %v219
  %v221 = vrot.slane %v56, %v220
  %v222 = vlaneseq
  %v223 = vshrl.u32 %v222, 7
  %v224 = vsub.s32 1, %v223
  %v225 = vrot.slane %v56, %v224
  %v228 = vmul.f32 %v185, %v221
  %v229 = vmul.f32 %v186, %v225
  %v230 = vmul.f32 %v187, %v221
  %v231 = vmul.f32 %v188, %v225
  %v232 = vmul.f32 %v189, %v221
  %v233 = vmul.f32 %v190, %v225
  %v234 = vmul.f32 %v191, %v221
  %v235 = vmul.f32 %v192, %v225
  %v236 = vmul.f32 %v193, %v221
  %v237 = vmul.f32 %v194, %v225
  %v238 = vmul.f32 %v195, %v221
  %v239 = vmul.f32 %v196, %v225
  %v240 = vmul.f32 %v197, %v221
  %v241 = vmul.f32 %v198, %v225
  %v242 = vmul.f32 %v199, %v221
  %v243 = vmul.f32 %v200, %v225
  %v244 = vmul.f32 %v201, %v221
  %v245 = vmul.f32 %v202, %v225
  %v246 = vmul.f32 %v203, %v221
  %v247 = vmul.f32 %v204, %v225
  %v248 = vmul.f32 %v205, %v221
  %v249 = vmul.f32 %v206, %v225
  %v250 = vmul.f32 %v207, %v221
  %v251 = vmul.f32 %v208, %v225
  %v252 = vmul.f32 %v209, %v221
  %v253 = vmul.f32 %v210, %v225
  %v254 = vmul.f32 %v211, %v221
  %v255 = vmul.f32 %v212, %v225
  %v256 = vmul.f32 %v213, %v221
  %v257 = vmul.f32 %v214, %v225
  %v258 = vmul.f32 %v215, %v221
  %v259 = vmul.f32 %v216, %v225
  %v260 = vpack.c.bf16 %v230, %v228
  %v261 = vpack.c.bf16 %v231, %v229
  %v262 = vpack.c.bf16 %v234, %v232
  %v263 = vpack.c.bf16 %v235, %v233
  %v264 = vpack.c.bf16 %v238, %v236
  %v265 = vpack.c.bf16 %v239, %v237
  %v266 = vpack.c.bf16 %v242, %v240
  %v267 = vpack.c.bf16 %v243, %v241
  %v268 = vpack.c.bf16 %v246, %v244
  %v269 = vpack.c.bf16 %v247, %v245
  %v270 = vpack.c.bf16 %v250, %v248
  %v271 = vpack.c.bf16 %v251, %v249
  %v272 = vpack.c.bf16 %v254, %v252
  %v273 = vpack.c.bf16 %v255, %v253
  %v274 = vpack.c.bf16 %v258, %v256
  %v275 = vpack.c.bf16 %v259, %v257
  %v276 = vld [vmem:[%s2] sm:$0xff]
  %v277 = vld [vmem:[%s2 + $0x8] sm:$0xff]
  %v278 = vld [vmem:[%s2 + $0x10] sm:$0xff]
  %v279 = vld [vmem:[%s2 + $0x18] sm:$0xff]
  %v280 = vld [vmem:[%s2 + $0x20] sm:$0xff]
  %v281 = vld [vmem:[%s2 + $0x28] sm:$0xff]
  %v282 = vld [vmem:[%s2 + $0x30] sm:$0xff]
  %v283 = vld [vmem:[%s2 + $0x38] sm:$0xff]
  %v284 = vld [vmem:[%s2 + $0x40] sm:$0xff]
  %v285 = vld [vmem:[%s2 + $0x48] sm:$0xff]
  %v286 = vld [vmem:[%s2 + $0x50] sm:$0xff]
  %v287 = vld [vmem:[%s2 + $0x58] sm:$0xff]
  %v288 = vld [vmem:[%s2 + $0x60] sm:$0xff]
  %v289 = vld [vmem:[%s2 + $0x68] sm:$0xff]
  %v290 = vld [vmem:[%s2 + $0x70] sm:$0xff]
  %v291 = vld [vmem:[%s2 + $0x78] sm:$0xff]
  %v292 = vld [vmem:[%s2 + $0x80] sm:$0xff]
  %v293 = vld [vmem:[%s2 + $0x88] sm:$0xff]
  %v294 = vld [vmem:[%s2 + $0x90] sm:$0xff]
  %v295 = vld [vmem:[%s2 + $0x98] sm:$0xff]
  %v296 = vld [vmem:[%s2 + $0xa0] sm:$0xff]
  %v297 = vld [vmem:[%s2 + $0xa8] sm:$0xff]
  %v298 = vld [vmem:[%s2 + $0xb0] sm:$0xff]
  %v299 = vld [vmem:[%s2 + $0xb8] sm:$0xff]
  %v300 = vld [vmem:[%s2 + $0xc0] sm:$0xff]
  %v301 = vld [vmem:[%s2 + $0xc8] sm:$0xff]
  %v302 = vld [vmem:[%s2 + $0xd0] sm:$0xff]
  %v303 = vld [vmem:[%s2 + $0xd8] sm:$0xff]
  %v304 = vld [vmem:[%s2 + $0xe0] sm:$0xff]
  %v305 = vld [vmem:[%s2 + $0xe8] sm:$0xff]
  %v306 = vld [vmem:[%s2 + $0xf0] sm:$0xff]
  %v307 = vld [vmem:[%s2 + $0xf8] sm:$0xff]
  %v340 = vunpack.c.l.b16 %v276
  %v341 = vunpack.c.h.b16 %v276
  %v342 = vunpack.c.l.b16 %v277
  %v343 = vunpack.c.h.b16 %v277
  %v344 = vunpack.c.l.b16 %v278
  %v345 = vunpack.c.h.b16 %v278
  %v346 = vunpack.c.l.b16 %v279
  %v347 = vunpack.c.h.b16 %v279
  %v348 = vunpack.c.l.b16 %v280
  %v349 = vunpack.c.h.b16 %v280
  %v350 = vunpack.c.l.b16 %v281
  %v351 = vunpack.c.h.b16 %v281
  %v352 = vunpack.c.l.b16 %v282
  %v353 = vunpack.c.h.b16 %v282
  %v354 = vunpack.c.l.b16 %v283
  %v355 = vunpack.c.h.b16 %v283
  %v356 = vunpack.c.l.b16 %v284
  %v357 = vunpack.c.h.b16 %v284
  %v358 = vunpack.c.l.b16 %v285
  %v359 = vunpack.c.h.b16 %v285
  %v360 = vunpack.c.l.b16 %v286
  %v361 = vunpack.c.h.b16 %v286
  %v362 = vunpack.c.l.b16 %v287
  %v363 = vunpack.c.h.b16 %v287
  %v364 = vunpack.c.l.b16 %v288
  %v365 = vunpack.c.h.b16 %v288
  %v366 = vunpack.c.l.b16 %v289
  %v367 = vunpack.c.h.b16 %v289
  %v368 = vunpack.c.l.b16 %v290
  %v369 = vunpack.c.h.b16 %v290
  %v370 = vunpack.c.l.b16 %v291
  %v371 = vunpack.c.h.b16 %v291
  %v372 = vunpack.c.l.b16 %v292
  %v373 = vunpack.c.h.b16 %v292
  %v374 = vunpack.c.l.b16 %v293
  %v375 = vunpack.c.h.b16 %v293
  %v376 = vunpack.c.l.b16 %v294
  %v377 = vunpack.c.h.b16 %v294
  %v378 = vunpack.c.l.b16 %v295
  %v379 = vunpack.c.h.b16 %v295
  %v380 = vunpack.c.l.b16 %v296
  %v381 = vunpack.c.h.b16 %v296
  %v382 = vunpack.c.l.b16 %v297
  %v383 = vunpack.c.h.b16 %v297
  %v384 = vunpack.c.l.b16 %v298
  %v385 = vunpack.c.h.b16 %v298
  %v386 = vunpack.c.l.b16 %v299
  %v387 = vunpack.c.h.b16 %v299
  %v388 = vunpack.c.l.b16 %v300
  %v389 = vunpack.c.h.b16 %v300
  %v390 = vunpack.c.l.b16 %v301
  %v391 = vunpack.c.h.b16 %v301
  %v392 = vunpack.c.l.b16 %v302
  %v393 = vunpack.c.h.b16 %v302
  %v394 = vunpack.c.l.b16 %v303
  %v395 = vunpack.c.h.b16 %v303
  %v396 = vunpack.c.l.b16 %v304
  %v397 = vunpack.c.h.b16 %v304
  %v398 = vunpack.c.l.b16 %v305
  %v399 = vunpack.c.h.b16 %v305
  %v400 = vunpack.c.l.b16 %v306
  %v401 = vunpack.c.h.b16 %v306
  %v402 = vunpack.c.l.b16 %v307
  %v403 = vunpack.c.h.b16 %v307
  %v404 = vpack.c.b16 %v342, %v340
  %v405 = vpack.c.b16 %v343, %v341
  %v406 = vpack.c.b16 %v346, %v344
  %v407 = vpack.c.b16 %v347, %v345
  %v408 = vpack.c.b16 %v350, %v348
  %v409 = vpack.c.b16 %v351, %v349
  %v410 = vpack.c.b16 %v354, %v352
  %v411 = vpack.c.b16 %v355, %v353
  %v412 = vpack.c.b16 %v358, %v356
  %v413 = vpack.c.b16 %v359, %v357
  %v414 = vpack.c.b16 %v362, %v360
  %v415 = vpack.c.b16 %v363, %v361
  %v416 = vpack.c.b16 %v366, %v364
  %v417 = vpack.c.b16 %v367, %v365
  %v418 = vpack.c.b16 %v370, %v368
  %v419 = vpack.c.b16 %v371, %v369
  %v420 = vpack.c.b16 %v374, %v372
  %v421 = vpack.c.b16 %v375, %v373
  %v422 = vpack.c.b16 %v378, %v376
  %v423 = vpack.c.b16 %v379, %v377
  %v424 = vpack.c.b16 %v382, %v380
  %v425 = vpack.c.b16 %v383, %v381
  %v426 = vpack.c.b16 %v386, %v384
  %v427 = vpack.c.b16 %v387, %v385
  %v428 = vpack.c.b16 %v390, %v388
  %v429 = vpack.c.b16 %v391, %v389
  %v430 = vpack.c.b16 %v394, %v392
  %v431 = vpack.c.b16 %v395, %v393
  %v432 = vpack.c.b16 %v398, %v396
  %v433 = vpack.c.b16 %v399, %v397
  %v434 = vpack.c.b16 %v402, %v400
  %v435 = vpack.c.b16 %v403, %v401
  %468 = vmatprep.subr.bf16.mxu0 %v405
  %469 = vmatpush1.bf16.msra.mxu0 %v404
  %470 = vmatprep.subr.bf16.mxu0 %v407
  %471 = vmatpush1.bf16.msra.mxu0 %v406
  %472 = vmatprep.subr.bf16.mxu0 %v409
  %473 = vmatpush1.bf16.msra.mxu0 %v408
  %474 = vmatprep.subr.bf16.mxu0 %v411
  %475 = vmatpush1.bf16.msra.mxu0 %v410
  %476 = vmatprep.subr.bf16.mxu0 %v413
  %477 = vmatpush1.bf16.msra.mxu0 %v412
  %478 = vmatprep.subr.bf16.mxu0 %v415
  %479 = vmatpush1.bf16.msra.mxu0 %v414
  %480 = vmatprep.subr.bf16.mxu0 %v417
  %481 = vmatpush1.bf16.msra.mxu0 %v416
  %482 = vmatprep.subr.bf16.mxu0 %v419
  %483 = vmatpush1.bf16.msra.mxu0 %v418
  %484 = vmatprep.subr.bf16.mxu0 %v421
  %485 = vmatpush1.bf16.msra.mxu0 %v420
  %486 = vmatprep.subr.bf16.mxu0 %v423
  %487 = vmatpush1.bf16.msra.mxu0 %v422
  %488 = vmatprep.subr.bf16.mxu0 %v425
  %489 = vmatpush1.bf16.msra.mxu0 %v424
  %490 = vmatprep.subr.bf16.mxu0 %v427
  %491 = vmatpush1.bf16.msra.mxu0 %v426
  %492 = vmatprep.subr.bf16.mxu0 %v429
  %493 = vmatpush1.bf16.msra.mxu0 %v428
  %494 = vmatprep.subr.bf16.mxu0 %v431
  %495 = vmatpush1.bf16.msra.mxu0 %v430
  %496 = vmatprep.subr.bf16.mxu0 %v433
  %497 = vmatpush1.bf16.msra.mxu0 %v432
  %498 = vmatprep.subr.bf16.mxu0 %v435
  %499 = vmatpush1.bf16.msra.mxu0 %v434
  %500 = vmatprep.mubr.bf16.mxu0 %v261
  %501 = vmatmul.mubr.bf16.gmra.mrb[0].mxu0 %v260
  %v502 = vpop.f32.mrb[0].mxu0
  %v503 = vadd.f32 0.0, %v502
  %v504 = vpop.f32.mrb[0].mxu0
  %v505 = vadd.f32 0.0, %v504
  %v506 = vpop.f32.mrb[0].mxu0
  %v507 = vadd.f32 0.0, %v506
  %v508 = vpop.f32.mrb[0].mxu0
  %v509 = vadd.f32 0.0, %v508
  %510 = vmatprep.mubr.bf16.mxu0 %v263
  %511 = vmatmul.mubr.bf16.gmra.mrb[0].mxu0 %v262
  %v512 = vpop.f32.mrb[0].mxu0
  %v513 = vadd.f32 0.0, %v512
  %v514 = vpop.f32.mrb[0].mxu0
  %v515 = vadd.f32 0.0, %v514
  %v516 = vpop.f32.mrb[0].mxu0
  %v517 = vadd.f32 0.0, %v516
  %v518 = vpop.f32.mrb[0].mxu0
  %v519 = vadd.f32 0.0, %v518
  %520 = vmatprep.mubr.bf16.mxu0 %v265
  %521 = vmatmul.mubr.bf16.gmra.mrb[0].mxu0 %v264
  %v522 = vpop.f32.mrb[0].mxu0
  %v523 = vadd.f32 0.0, %v522
  %v524 = vpop.f32.mrb[0].mxu0
  %v525 = vadd.f32 0.0, %v524
  %v526 = vpop.f32.mrb[0].mxu0
  %v527 = vadd.f32 0.0, %v526
  %v528 = vpop.f32.mrb[0].mxu0
  %v529 = vadd.f32 0.0, %v528
  %530 = vmatprep.mubr.bf16.mxu0 %v267
  %531 = vmatmul.mubr.bf16.gmra.mrb[0].mxu0 %v266
  %v532 = vpop.f32.mrb[0].mxu0
  %v533 = vadd.f32 0.0, %v532
  %v534 = vpop.f32.mrb[0].mxu0
  %v535 = vadd.f32 0.0, %v534
  %v536 = vpop.f32.mrb[0].mxu0
  %v537 = vadd.f32 0.0, %v536
  %v538 = vpop.f32.mrb[0].mxu0
  %v539 = vadd.f32 0.0, %v538
  %540 = vmatprep.mubr.bf16.mxu0 %v269
  %541 = vmatmul.mubr.bf16.gmra.mrb[0].mxu0 %v268
  %v542 = vpop.f32.mrb[0].mxu0
  %v543 = vadd.f32 0.0, %v542
  %v544 = vpop.f32.mrb[0].mxu0
  %v545 = vadd.f32 0.0, %v544
  %v546 = vpop.f32.mrb[0].mxu0
  %v547 = vadd.f32 0.0, %v546
  %v548 = vpop.f32.mrb[0].mxu0
  %v549 = vadd.f32 0.0, %v548
  %550 = vmatprep.mubr.bf16.mxu0 %v271
  %551 = vmatmul.mubr.bf16.gmra.mrb[0].mxu0 %v270
  %v552 = vpop.f32.mrb[0].mxu0
  %v553 = vadd.f32 0.0, %v552
  %v554 = vpop.f32.mrb[0].mxu0
  %v555 = vadd.f32 0.0, %v554
  %v556 = vpop.f32.mrb[0].mxu0
  %v557 = vadd.f32 0.0, %v556
  %v558 = vpop.f32.mrb[0].mxu0
  %v559 = vadd.f32 0.0, %v558
  %560 = vmatprep.mubr.bf16.mxu0 %v273
  %561 = vmatmul.mubr.bf16.gmra.mrb[0].mxu0 %v272
  %v562 = vpop.f32.mrb[0].mxu0
  %v563 = vadd.f32 0.0, %v562
  %v564 = vpop.f32.mrb[0].mxu0
  %v565 = vadd.f32 0.0, %v564
  %v566 = vpop.f32.mrb[0].mxu0
  %v567 = vadd.f32 0.0, %v566
  %v568 = vpop.f32.mrb[0].mxu0
  %v569 = vadd.f32 0.0, %v568
  %570 = vmatprep.mubr.bf16.mxu0 %v275
  %571 = vmatmul.mubr.bf16.gmra.mrb[0].mxu0 %v274
  %v572 = vpop.f32.mrb[0].mxu0
  %v573 = vadd.f32 0.0, %v572
  %v574 = vpop.f32.mrb[0].mxu0
  %v575 = vadd.f32 0.0, %v574
  %v576 = vpop.f32.mrb[0].mxu0
  %v577 = vadd.f32 0.0, %v576
  %v578 = vpop.f32.mrb[0].mxu0
  %v579 = vadd.f32 0.0, %v578
  %580 = vdwg.mxu0
  %v581 = vxor.u32 %v503, 2147483648
  %v582 = vxor.u32 %v507, 2147483648
  %v583 = vxor.u32 %v513, 2147483648
  %v584 = vxor.u32 %v517, 2147483648
  %v585 = vxor.u32 %v523, 2147483648
  %v586 = vxor.u32 %v527, 2147483648
  %v587 = vxor.u32 %v533, 2147483648
  %v588 = vxor.u32 %v537, 2147483648
  %v589 = vxor.u32 %v543, 2147483648
  %v590 = vxor.u32 %v547, 2147483648
  %v591 = vxor.u32 %v553, 2147483648
  %v592 = vxor.u32 %v557, 2147483648
  %v593 = vxor.u32 %v563, 2147483648
  %v594 = vxor.u32 %v567, 2147483648
  %v595 = vxor.u32 %v573, 2147483648
  %v596 = vxor.u32 %v577, 2147483648
  %v597 = vmul.f32 %v581, 1.442695
  %v598 = vpow.pop %v597
  %v599 = vmul.f32 %v582, 1.442695
  %v600 = vpow.pop %v599
  %v601 = vmul.f32 %v583, 1.442695
  %v602 = vpow.pop %v601
  %v603 = vmul.f32 %v584, 1.442695
  %v604 = vpow.pop %v603
  %v605 = vmul.f32 %v585, 1.442695
  %v606 = vpow.pop %v605
  %v607 = vmul.f32 %v586, 1.442695
  %v608 = vpow.pop %v607
  %v609 = vmul.f32 %v587, 1.442695
  %v610 = vpow.pop %v609
  %v611 = vmul.f32 %v588, 1.442695
  %v612 = vpow.pop %v611
  %v613 = vmul.f32 %v589, 1.442695
  %v614 = vpow.pop %v613
  %v615 = vmul.f32 %v590, 1.442695
  %v616 = vpow.pop %v615
  %v617 = vmul.f32 %v591, 1.442695
  %v618 = vpow.pop %v617
  %v619 = vmul.f32 %v592, 1.442695
  %v620 = vpow.pop %v619
  %v621 = vmul.f32 %v593, 1.442695
  %v622 = vpow.pop %v621
  %v623 = vmul.f32 %v594, 1.442695
  %v624 = vpow.pop %v623
  %v625 = vmul.f32 %v595, 1.442695
  %v626 = vpow.pop %v625
  %v627 = vmul.f32 %v596, 1.442695
  %v628 = vpow.pop %v627
  %v629 = vadd.f32 %v598, 1.0
  %v630 = vadd.f32 %v600, 1.0
  %v631 = vadd.f32 %v602, 1.0
  %v632 = vadd.f32 %v604, 1.0
  %v633 = vadd.f32 %v606, 1.0
  %v634 = vadd.f32 %v608, 1.0
  %v635 = vadd.f32 %v610, 1.0
  %v636 = vadd.f32 %v612, 1.0
  %v637 = vadd.f32 %v614, 1.0
  %v638 = vadd.f32 %v616, 1.0
  %v639 = vadd.f32 %v618, 1.0
  %v640 = vadd.f32 %v620, 1.0
  %v641 = vadd.f32 %v622, 1.0
  %v642 = vadd.f32 %v624, 1.0
  %v643 = vadd.f32 %v626, 1.0
  %v644 = vadd.f32 %v628, 1.0
  %v645 = vrcp.pop %v629
  %v646 = vmul.f32 1.0, %v645
  %v647 = vrcp.pop %v630
  %v648 = vmul.f32 1.0, %v647
  %v649 = vrcp.pop %v631
  %v650 = vmul.f32 1.0, %v649
  %v651 = vrcp.pop %v632
  %v652 = vmul.f32 1.0, %v651
  %v653 = vrcp.pop %v633
  %v654 = vmul.f32 1.0, %v653
  %v655 = vrcp.pop %v634
  %v656 = vmul.f32 1.0, %v655
  %v657 = vrcp.pop %v635
  %v658 = vmul.f32 1.0, %v657
  %v659 = vrcp.pop %v636
  %v660 = vmul.f32 1.0, %v659
  %v661 = vrcp.pop %v637
  %v662 = vmul.f32 1.0, %v661
  %v663 = vrcp.pop %v638
  %v664 = vmul.f32 1.0, %v663
  %v665 = vrcp.pop %v639
  %v666 = vmul.f32 1.0, %v665
  %v667 = vrcp.pop %v640
  %v668 = vmul.f32 1.0, %v667
  %v669 = vrcp.pop %v641
  %v670 = vmul.f32 1.0, %v669
  %v671 = vrcp.pop %v642
  %v672 = vmul.f32 1.0, %v671
  %v673 = vrcp.pop %v643
  %v674 = vmul.f32 1.0, %v673
  %v675 = vrcp.pop %v644
  %v676 = vmul.f32 1.0, %v675
  %v677 = vmul.f32 %v503, %v646
  %v678 = vmul.f32 %v507, %v648
  %v679 = vmul.f32 %v513, %v650
  %v680 = vmul.f32 %v517, %v652
  %v681 = vmul.f32 %v523, %v654
  %v682 = vmul.f32 %v527, %v656
  %v683 = vmul.f32 %v533, %v658
  %v684 = vmul.f32 %v537, %v660
  %v685 = vmul.f32 %v543, %v662
  %v686 = vmul.f32 %v547, %v664
  %v687 = vmul.f32 %v553, %v666
  %v688 = vmul.f32 %v557, %v668
  %v689 = vmul.f32 %v563, %v670
  %v690 = vmul.f32 %v567, %v672
  %v691 = vmul.f32 %v573, %v674
  %v692 = vmul.f32 %v577, %v676
  %v693 = vmul.f32 %v677, %v505
  %v694 = vmul.f32 %v678, %v509
  %v695 = vmul.f32 %v679, %v515
  %v696 = vmul.f32 %v680, %v519
  %v697 = vmul.f32 %v681, %v525
  %v698 = vmul.f32 %v682, %v529
  %v699 = vmul.f32 %v683, %v535
  %v700 = vmul.f32 %v684, %v539
  %v701 = vmul.f32 %v685, %v545
  %v702 = vmul.f32 %v686, %v549
  %v703 = vmul.f32 %v687, %v555
  %v704 = vmul.f32 %v688, %v559
  %v705 = vmul.f32 %v689, %v565
  %v706 = vmul.f32 %v690, %v569
  %v707 = vmul.f32 %v691, %v575
  %v708 = vmul.f32 %v692, %v579
  %v709 = vpack.c.bf16 %v694, %v693
  %v710 = vpack.c.bf16 %v696, %v695
  %v711 = vpack.c.bf16 %v698, %v697
  %v712 = vpack.c.bf16 %v700, %v699
  %v713 = vpack.c.bf16 %v702, %v701
  %v714 = vpack.c.bf16 %v704, %v703
  %v715 = vpack.c.bf16 %v706, %v705
  %v716 = vpack.c.bf16 %v708, %v707
  %v717 = vld [vmem:[%s3] sm:$0xff]
  %v718 = vld [vmem:[%s3 + $0x8] sm:$0xff]
  %v719 = vld [vmem:[%s3 + $0x10] sm:$0xff]
  %v720 = vld [vmem:[%s3 + $0x18] sm:$0xff]
  %v721 = vld [vmem:[%s3 + $0x20] sm:$0xff]
  %v722 = vld [vmem:[%s3 + $0x28] sm:$0xff]
  %v723 = vld [vmem:[%s3 + $0x30] sm:$0xff]
  %v724 = vld [vmem:[%s3 + $0x38] sm:$0xff]
  %v725 = vld [vmem:[%s3 + $0x40] sm:$0xff]
  %v726 = vld [vmem:[%s3 + $0x48] sm:$0xff]
  %v727 = vld [vmem:[%s3 + $0x50] sm:$0xff]
  %v728 = vld [vmem:[%s3 + $0x58] sm:$0xff]
  %v729 = vld [vmem:[%s3 + $0x60] sm:$0xff]
  %v730 = vld [vmem:[%s3 + $0x68] sm:$0xff]
  %v731 = vld [vmem:[%s3 + $0x70] sm:$0xff]
  %v732 = vld [vmem:[%s3 + $0x78] sm:$0xff]
  %v749 = vunpack.c.l.b16 %v717
  %v750 = vunpack.c.h.b16 %v717
  %v751 = vunpack.c.l.b16 %v718
  %v752 = vunpack.c.h.b16 %v718
  %v753 = vunpack.c.l.b16 %v719
  %v754 = vunpack.c.h.b16 %v719
  %v755 = vunpack.c.l.b16 %v720
  %v756 = vunpack.c.h.b16 %v720
  %v757 = vunpack.c.l.b16 %v721
  %v758 = vunpack.c.h.b16 %v721
  %v759 = vunpack.c.l.b16 %v722
  %v760 = vunpack.c.h.b16 %v722
  %v761 = vunpack.c.l.b16 %v723
  %v762 = vunpack.c.h.b16 %v723
  %v763 = vunpack.c.l.b16 %v724
  %v764 = vunpack.c.h.b16 %v724
  %v765 = vunpack.c.l.b16 %v725
  %v766 = vunpack.c.h.b16 %v725
  %v767 = vunpack.c.l.b16 %v726
  %v768 = vunpack.c.h.b16 %v726
  %v769 = vunpack.c.l.b16 %v727
  %v770 = vunpack.c.h.b16 %v727
  %v771 = vunpack.c.l.b16 %v728
  %v772 = vunpack.c.h.b16 %v728
  %v773 = vunpack.c.l.b16 %v729
  %v774 = vunpack.c.h.b16 %v729
  %v775 = vunpack.c.l.b16 %v730
  %v776 = vunpack.c.h.b16 %v730
  %v777 = vunpack.c.l.b16 %v731
  %v778 = vunpack.c.h.b16 %v731
  %v779 = vunpack.c.l.b16 %v732
  %v780 = vunpack.c.h.b16 %v732
  %v781 = vpack.c.b16 %v751, %v749
  %v782 = vpack.c.b16 %v752, %v750
  %v783 = vpack.c.b16 %v755, %v753
  %v784 = vpack.c.b16 %v756, %v754
  %v785 = vpack.c.b16 %v759, %v757
  %v786 = vpack.c.b16 %v760, %v758
  %v787 = vpack.c.b16 %v763, %v761
  %v788 = vpack.c.b16 %v764, %v762
  %v789 = vpack.c.b16 %v767, %v765
  %v790 = vpack.c.b16 %v768, %v766
  %v791 = vpack.c.b16 %v771, %v769
  %v792 = vpack.c.b16 %v772, %v770
  %v793 = vpack.c.b16 %v775, %v773
  %v794 = vpack.c.b16 %v776, %v774
  %v795 = vpack.c.b16 %v779, %v777
  %v796 = vpack.c.b16 %v780, %v778
  %813 = vmatprep.subr.bf16.mxu0 %v782
  %814 = vmatpush1.bf16.msra.mxu0 %v781
  %815 = vmatprep.subr.bf16.mxu0 %v784
  %816 = vmatpush1.bf16.msra.mxu0 %v783
  %817 = vmatprep.subr.bf16.mxu0 %v786
  %818 = vmatpush1.bf16.msra.mxu0 %v785
  %819 = vmatprep.subr.bf16.mxu0 %v788
  %820 = vmatpush1.bf16.msra.mxu0 %v787
  %821 = vmatprep.subr.bf16.mxu0 %v790
  %822 = vmatpush1.bf16.msra.mxu0 %v789
  %823 = vmatprep.subr.bf16.mxu0 %v792
  %824 = vmatpush1.bf16.msra.mxu0 %v791
  %825 = vmatprep.subr.bf16.mxu0 %v794
  %826 = vmatpush1.bf16.msra.mxu0 %v793
  %827 = vmatprep.subr.bf16.mxu0 %v796
  %828 = vmatpush1.bf16.msra.mxu0 %v795
  %829 = vmatprep.subr.bf16.mxu0 0
  %830 = vmatpush1.bf16.msra.mxu0 0
  %831 = vmatprep.subr.bf16.mxu0 0
  %832 = vmatpush1.bf16.msra.mxu0 0
  %833 = vmatprep.subr.bf16.mxu0 0
  %834 = vmatpush1.bf16.msra.mxu0 0
  %835 = vmatprep.subr.bf16.mxu0 0
  %836 = vmatpush1.bf16.msra.mxu0 0
  %837 = vmatprep.subr.bf16.mxu0 0
  %838 = vmatpush1.bf16.msra.mxu0 0
  %839 = vmatprep.subr.bf16.mxu0 0
  %840 = vmatpush1.bf16.msra.mxu0 0
  %841 = vmatprep.subr.bf16.mxu0 0
  %842 = vmatpush1.bf16.msra.mxu0 0
  %843 = vmatprep.subr.bf16.mxu0 0
  %844 = vmatpush1.bf16.msra.mxu0 0
  %845 = vmatprep.mubr.bf16.mxu0 0
  %846 = vmatmul.mubr.bf16.gmra.mrb[0].mxu0 %v709
  %v847 = vpop.f32.mrb[0].mxu0
  %v848 = vadd.f32 0.0, %v847
  %v849 = vpop.f32.mrb[0].mxu0
  %v850 = vadd.f32 0.0, %v849
  %v851 = vpop.f32.mrb[0].mxu0
  %v852 = vadd.f32 0.0, %v851
  %v853 = vpop.f32.mrb[0].mxu0
  %v854 = vadd.f32 0.0, %v853
  %855 = vmatprep.mubr.bf16.mxu0 0
  %856 = vmatmul.mubr.bf16.gmra.mrb[0].mxu0 %v710
  %v857 = vpop.f32.mrb[0].mxu0
  %v858 = vadd.f32 0.0, %v857
  %v859 = vpop.f32.mrb[0].mxu0
  %v860 = vadd.f32 0.0, %v859
  %v861 = vpop.f32.mrb[0].mxu0
  %v862 = vadd.f32 0.0, %v861
  %v863 = vpop.f32.mrb[0].mxu0
  %v864 = vadd.f32 0.0, %v863
  %865 = vmatprep.mubr.bf16.mxu0 0
  %866 = vmatmul.mubr.bf16.gmra.mrb[0].mxu0 %v711
  %v867 = vpop.f32.mrb[0].mxu0
  %v868 = vadd.f32 0.0, %v867
  %v869 = vpop.f32.mrb[0].mxu0
  %v870 = vadd.f32 0.0, %v869
  %v871 = vpop.f32.mrb[0].mxu0
  %v872 = vadd.f32 0.0, %v871
  %v873 = vpop.f32.mrb[0].mxu0
  %v874 = vadd.f32 0.0, %v873
  %875 = vmatprep.mubr.bf16.mxu0 0
  %876 = vmatmul.mubr.bf16.gmra.mrb[0].mxu0 %v712
  %v877 = vpop.f32.mrb[0].mxu0
  %v878 = vadd.f32 0.0, %v877
  %v879 = vpop.f32.mrb[0].mxu0
  %v880 = vadd.f32 0.0, %v879
  %v881 = vpop.f32.mrb[0].mxu0
  %v882 = vadd.f32 0.0, %v881
  %v883 = vpop.f32.mrb[0].mxu0
  %v884 = vadd.f32 0.0, %v883
  %885 = vmatprep.mubr.bf16.mxu0 0
  %886 = vmatmul.mubr.bf16.gmra.mrb[0].mxu0 %v713
  %v887 = vpop.f32.mrb[0].mxu0
  %v888 = vadd.f32 0.0, %v887
  %v889 = vpop.f32.mrb[0].mxu0
  %v890 = vadd.f32 0.0, %v889
  %v891 = vpop.f32.mrb[0].mxu0
  %v892 = vadd.f32 0.0, %v891
  %v893 = vpop.f32.mrb[0].mxu0
  %v894 = vadd.f32 0.0, %v893
  %895 = vmatprep.mubr.bf16.mxu0 0
  %896 = vmatmul.mubr.bf16.gmra.mrb[0].mxu0 %v714
  %v897 = vpop.f32.mrb[0].mxu0
  %v898 = vadd.f32 0.0, %v897
  %v899 = vpop.f32.mrb[0].mxu0
  %v900 = vadd.f32 0.0, %v899
  %v901 = vpop.f32.mrb[0].mxu0
  %v902 = vadd.f32 0.0, %v901
  %v903 = vpop.f32.mrb[0].mxu0
  %v904 = vadd.f32 0.0, %v903
  %905 = vmatprep.mubr.bf16.mxu0 0
  %906 = vmatmul.mubr.bf16.gmra.mrb[0].mxu0 %v715
  %v907 = vpop.f32.mrb[0].mxu0
  %v908 = vadd.f32 0.0, %v907
  %v909 = vpop.f32.mrb[0].mxu0
  %v910 = vadd.f32 0.0, %v909
  %v911 = vpop.f32.mrb[0].mxu0
  %v912 = vadd.f32 0.0, %v911
  %v913 = vpop.f32.mrb[0].mxu0
  %v914 = vadd.f32 0.0, %v913
  %915 = vmatprep.mubr.bf16.mxu0 0
  %916 = vmatmul.mubr.bf16.gmra.mrb[0].mxu0 %v716
  %v917 = vpop.f32.mrb[0].mxu0
  %v918 = vadd.f32 0.0, %v917
  %v919 = vpop.f32.mrb[0].mxu0
  %v920 = vadd.f32 0.0, %v919
  %v921 = vpop.f32.mrb[0].mxu0
  %v922 = vadd.f32 0.0, %v921
  %v923 = vpop.f32.mrb[0].mxu0
  %v924 = vadd.f32 0.0, %v923
  %925 = vdwg.mxu0
  %v926 = vadd.f32 %v24, %v848
  %v927 = vadd.f32 %v25, %v850
  %v928 = vadd.f32 %v26, %v852
  %v929 = vadd.f32 %v27, %v854
  %v930 = vadd.f32 %v28, %v858
  %v931 = vadd.f32 %v29, %v860
  %v932 = vadd.f32 %v30, %v862
  %v933 = vadd.f32 %v31, %v864
  %v934 = vadd.f32 %v32, %v868
  %v935 = vadd.f32 %v33, %v870
  %v936 = vadd.f32 %v34, %v872
  %v937 = vadd.f32 %v35, %v874
  %v938 = vadd.f32 %v36, %v878
  %v939 = vadd.f32 %v37, %v880
  %v940 = vadd.f32 %v38, %v882
  %v941 = vadd.f32 %v39, %v884
  %v942 = vadd.f32 %v40, %v888
  %v943 = vadd.f32 %v41, %v890
  %v944 = vadd.f32 %v42, %v892
  %v945 = vadd.f32 %v43, %v894
  %v946 = vadd.f32 %v44, %v898
  %v947 = vadd.f32 %v45, %v900
  %v948 = vadd.f32 %v46, %v902
  %v949 = vadd.f32 %v47, %v904
  %v950 = vadd.f32 %v48, %v908
  %v951 = vadd.f32 %v49, %v910
  %v952 = vadd.f32 %v50, %v912
  %v953 = vadd.f32 %v51, %v914
  %v954 = vadd.f32 %v52, %v918
  %v955 = vadd.f32 %v53, %v920
  %v956 = vadd.f32 %v54, %v922
  %v957 = vadd.f32 %v55, %v924
  %s958 = scalar_lea.vmem %s1, 2
  %v959 = vld [vmem:[%s958] sm:$0x3]
  %v960 = vmul.f32 %v926, %v926
  %v961 = vmul.f32 %v927, %v927
  %v962 = vmul.f32 %v928, %v928
  %v963 = vmul.f32 %v929, %v929
  %v964 = vmul.f32 %v930, %v930
  %v965 = vmul.f32 %v931, %v931
  %v966 = vmul.f32 %v932, %v932
  %v967 = vmul.f32 %v933, %v933
  %v968 = vmul.f32 %v934, %v934
  %v969 = vmul.f32 %v935, %v935
  %v970 = vmul.f32 %v936, %v936
  %v971 = vmul.f32 %v937, %v937
  %v972 = vmul.f32 %v938, %v938
  %v973 = vmul.f32 %v939, %v939
  %v974 = vmul.f32 %v940, %v940
  %v975 = vmul.f32 %v941, %v941
  %v976 = vmul.f32 %v942, %v942
  %v977 = vmul.f32 %v943, %v943
  %v978 = vmul.f32 %v944, %v944
  %v979 = vmul.f32 %v945, %v945
  %v980 = vmul.f32 %v946, %v946
  %v981 = vmul.f32 %v947, %v947
  %v982 = vmul.f32 %v948, %v948
  %v983 = vmul.f32 %v949, %v949
  %v984 = vmul.f32 %v950, %v950
  %v985 = vmul.f32 %v951, %v951
  %v986 = vmul.f32 %v952, %v952
  %v987 = vmul.f32 %v953, %v953
  %v988 = vmul.f32 %v954, %v954
  %v989 = vmul.f32 %v955, %v955
  %v990 = vmul.f32 %v956, %v956
  %v991 = vmul.f32 %v957, %v957
  %v992 = vadd.f32 %v960, %v961
  %993 = vadd.xlane.f32.xlu0 %v992
  %v994 = vpop.xlane.xlu0 %993
  %v995 = vadd.f32 %v962, %v963
  %996 = vadd.xlane.f32.xlu0 %v995
  %v997 = vpop.xlane.xlu0 %996
  %v998 = vadd.f32 %v964, %v965
  %999 = vadd.xlane.f32.xlu0 %v998
  %v1000 = vpop.xlane.xlu0 %999
  %v1001 = vadd.f32 %v966, %v967
  %1002 = vadd.xlane.f32.xlu0 %v1001
  %v1003 = vpop.xlane.xlu0 %1002
  %v1004 = vadd.f32 %v968, %v969
  %1005 = vadd.xlane.f32.xlu0 %v1004
  %v1006 = vpop.xlane.xlu0 %1005
  %v1007 = vadd.f32 %v970, %v971
  %1008 = vadd.xlane.f32.xlu0 %v1007
  %v1009 = vpop.xlane.xlu0 %1008
  %v1010 = vadd.f32 %v972, %v973
  %1011 = vadd.xlane.f32.xlu0 %v1010
  %v1012 = vpop.xlane.xlu0 %1011
  %v1013 = vadd.f32 %v974, %v975
  %1014 = vadd.xlane.f32.xlu0 %v1013
  %v1015 = vpop.xlane.xlu0 %1014
  %v1016 = vadd.f32 %v976, %v977
  %1017 = vadd.xlane.f32.xlu0 %v1016
  %v1018 = vpop.xlane.xlu0 %1017
  %v1019 = vadd.f32 %v978, %v979
  %1020 = vadd.xlane.f32.xlu0 %v1019
  %v1021 = vpop.xlane.xlu0 %1020
  %v1022 = vadd.f32 %v980, %v981
  %1023 = vadd.xlane.f32.xlu0 %v1022
  %v1024 = vpop.xlane.xlu0 %1023
  %v1025 = vadd.f32 %v982, %v983
  %1026 = vadd.xlane.f32.xlu0 %v1025
  %v1027 = vpop.xlane.xlu0 %1026
  %v1028 = vadd.f32 %v984, %v985
  %1029 = vadd.xlane.f32.xlu0 %v1028
  %v1030 = vpop.xlane.xlu0 %1029
  %v1031 = vadd.f32 %v986, %v987
  %1032 = vadd.xlane.f32.xlu0 %v1031
  %v1033 = vpop.xlane.xlu0 %1032
  %v1034 = vadd.f32 %v988, %v989
  %1035 = vadd.xlane.f32.xlu0 %v1034
  %v1036 = vpop.xlane.xlu0 %1035
  %v1037 = vadd.f32 %v990, %v991
  %1038 = vadd.xlane.f32.xlu0 %v1037
  %v1039 = vpop.xlane.xlu0 %1038
  %v1040 = vmul.f32 %v994, 0.0052083335
  %v1041 = vmul.f32 %v997, 0.0052083335
  %v1042 = vmul.f32 %v1000, 0.0052083335
  %v1043 = vmul.f32 %v1003, 0.0052083335
  %v1044 = vmul.f32 %v1006, 0.0052083335
  %v1045 = vmul.f32 %v1009, 0.0052083335
  %v1046 = vmul.f32 %v1012, 0.0052083335
  %v1047 = vmul.f32 %v1015, 0.0052083335
  %v1048 = vmul.f32 %v1018, 0.0052083335
  %v1049 = vmul.f32 %v1021, 0.0052083335
  %v1050 = vmul.f32 %v1024, 0.0052083335
  %v1051 = vmul.f32 %v1027, 0.0052083335
  %v1052 = vmul.f32 %v1030, 0.0052083335
  %v1053 = vmul.f32 %v1033, 0.0052083335
  %v1054 = vmul.f32 %v1036, 0.0052083335
  %v1055 = vmul.f32 %v1039, 0.0052083335
  %v1056 = vadd.f32 %v1040, 1e-05
  %v1057 = vadd.f32 %v1041, 1e-05
  %v1058 = vadd.f32 %v1042, 1e-05
  %v1059 = vadd.f32 %v1043, 1e-05
  %v1060 = vadd.f32 %v1044, 1e-05
  %v1061 = vadd.f32 %v1045, 1e-05
  %v1062 = vadd.f32 %v1046, 1e-05
  %v1063 = vadd.f32 %v1047, 1e-05
  %v1064 = vadd.f32 %v1048, 1e-05
  %v1065 = vadd.f32 %v1049, 1e-05
  %v1066 = vadd.f32 %v1050, 1e-05
  %v1067 = vadd.f32 %v1051, 1e-05
  %v1068 = vadd.f32 %v1052, 1e-05
  %v1069 = vadd.f32 %v1053, 1e-05
  %v1070 = vadd.f32 %v1054, 1e-05
  %v1071 = vadd.f32 %v1055, 1e-05
  %v1072 = vrsqrt.pop %v1056
  %v1073 = vrsqrt.pop %v1057
  %v1074 = vrsqrt.pop %v1058
  %v1075 = vrsqrt.pop %v1059
  %v1076 = vrsqrt.pop %v1060
  %v1077 = vrsqrt.pop %v1061
  %v1078 = vrsqrt.pop %v1062
  %v1079 = vrsqrt.pop %v1063
  %v1080 = vrsqrt.pop %v1064
  %v1081 = vrsqrt.pop %v1065
  %v1082 = vrsqrt.pop %v1066
  %v1083 = vrsqrt.pop %v1067
  %v1084 = vrsqrt.pop %v1068
  %v1085 = vrsqrt.pop %v1069
  %v1086 = vrsqrt.pop %v1070
  %v1087 = vrsqrt.pop %v1071
  %v1088 = vmul.f32 %v926, %v1072
  %v1089 = vmul.f32 %v927, %v1072
  %v1090 = vmul.f32 %v928, %v1073
  %v1091 = vmul.f32 %v929, %v1073
  %v1092 = vmul.f32 %v930, %v1074
  %v1093 = vmul.f32 %v931, %v1074
  %v1094 = vmul.f32 %v932, %v1075
  %v1095 = vmul.f32 %v933, %v1075
  %v1096 = vmul.f32 %v934, %v1076
  %v1097 = vmul.f32 %v935, %v1076
  %v1098 = vmul.f32 %v936, %v1077
  %v1099 = vmul.f32 %v937, %v1077
  %v1100 = vmul.f32 %v938, %v1078
  %v1101 = vmul.f32 %v939, %v1078
  %v1102 = vmul.f32 %v940, %v1079
  %v1103 = vmul.f32 %v941, %v1079
  %v1104 = vmul.f32 %v942, %v1080
  %v1105 = vmul.f32 %v943, %v1080
  %v1106 = vmul.f32 %v944, %v1081
  %v1107 = vmul.f32 %v945, %v1081
  %v1108 = vmul.f32 %v946, %v1082
  %v1109 = vmul.f32 %v947, %v1082
  %v1110 = vmul.f32 %v948, %v1083
  %v1111 = vmul.f32 %v949, %v1083
  %v1112 = vmul.f32 %v950, %v1084
  %v1113 = vmul.f32 %v951, %v1084
  %v1114 = vmul.f32 %v952, %v1085
  %v1115 = vmul.f32 %v953, %v1085
  %v1116 = vmul.f32 %v954, %v1086
  %v1117 = vmul.f32 %v955, %v1086
  %v1118 = vmul.f32 %v956, %v1087
  %v1119 = vmul.f32 %v957, %v1087
  %v1121 = vlaneseq
  %v1122 = vshrl.u32 %v1121, 7
  %v1123 = vsub.s32 0, %v1122
  %v1124 = vrot.slane %v959, %v1123
  %v1125 = vlaneseq
  %v1126 = vshrl.u32 %v1125, 7
  %v1127 = vsub.s32 1, %v1126
  %v1128 = vrot.slane %v959, %v1127
  %v1131 = vmul.f32 %v1088, %v1124
  %v1132 = vmul.f32 %v1089, %v1128
  %v1133 = vmul.f32 %v1090, %v1124
  %v1134 = vmul.f32 %v1091, %v1128
  %v1135 = vmul.f32 %v1092, %v1124
  %v1136 = vmul.f32 %v1093, %v1128
  %v1137 = vmul.f32 %v1094, %v1124
  %v1138 = vmul.f32 %v1095, %v1128
  %v1139 = vmul.f32 %v1096, %v1124
  %v1140 = vmul.f32 %v1097, %v1128
  %v1141 = vmul.f32 %v1098, %v1124
  %v1142 = vmul.f32 %v1099, %v1128
  %v1143 = vmul.f32 %v1100, %v1124
  %v1144 = vmul.f32 %v1101, %v1128
  %v1145 = vmul.f32 %v1102, %v1124
  %v1146 = vmul.f32 %v1103, %v1128
  %v1147 = vmul.f32 %v1104, %v1124
  %v1148 = vmul.f32 %v1105, %v1128
  %v1149 = vmul.f32 %v1106, %v1124
  %v1150 = vmul.f32 %v1107, %v1128
  %v1151 = vmul.f32 %v1108, %v1124
  %v1152 = vmul.f32 %v1109, %v1128
  %v1153 = vmul.f32 %v1110, %v1124
  %v1154 = vmul.f32 %v1111, %v1128
  %v1155 = vmul.f32 %v1112, %v1124
  %v1156 = vmul.f32 %v1113, %v1128
  %v1157 = vmul.f32 %v1114, %v1124
  %v1158 = vmul.f32 %v1115, %v1128
  %v1159 = vmul.f32 %v1116, %v1124
  %v1160 = vmul.f32 %v1117, %v1128
  %v1161 = vmul.f32 %v1118, %v1124
  %v1162 = vmul.f32 %v1119, %v1128
  %v1163 = vpack.c.bf16 %v1133, %v1131
  %v1164 = vpack.c.bf16 %v1134, %v1132
  %v1165 = vpack.c.bf16 %v1137, %v1135
  %v1166 = vpack.c.bf16 %v1138, %v1136
  %v1167 = vpack.c.bf16 %v1141, %v1139
  %v1168 = vpack.c.bf16 %v1142, %v1140
  %v1169 = vpack.c.bf16 %v1145, %v1143
  %v1170 = vpack.c.bf16 %v1146, %v1144
  %v1171 = vpack.c.bf16 %v1149, %v1147
  %v1172 = vpack.c.bf16 %v1150, %v1148
  %v1173 = vpack.c.bf16 %v1153, %v1151
  %v1174 = vpack.c.bf16 %v1154, %v1152
  %v1175 = vpack.c.bf16 %v1157, %v1155
  %v1176 = vpack.c.bf16 %v1158, %v1156
  %v1177 = vpack.c.bf16 %v1161, %v1159
  %v1178 = vpack.c.bf16 %v1162, %v1160
  %s1179 = scalar_lea.vmem %s2, 256
  %v1180 = vld [vmem:[%s1179] sm:$0xff]
  %v1181 = vld [vmem:[%s1179 + $0x8] sm:$0xff]
  %v1182 = vld [vmem:[%s1179 + $0x10] sm:$0xff]
  %v1183 = vld [vmem:[%s1179 + $0x18] sm:$0xff]
  %v1184 = vld [vmem:[%s1179 + $0x20] sm:$0xff]
  %v1185 = vld [vmem:[%s1179 + $0x28] sm:$0xff]
  %v1186 = vld [vmem:[%s1179 + $0x30] sm:$0xff]
  %v1187 = vld [vmem:[%s1179 + $0x38] sm:$0xff]
  %v1188 = vld [vmem:[%s1179 + $0x40] sm:$0xff]
  %v1189 = vld [vmem:[%s1179 + $0x48] sm:$0xff]
  %v1190 = vld [vmem:[%s1179 + $0x50] sm:$0xff]
  %v1191 = vld [vmem:[%s1179 + $0x58] sm:$0xff]
  %v1192 = vld [vmem:[%s1179 + $0x60] sm:$0xff]
  %v1193 = vld [vmem:[%s1179 + $0x68] sm:$0xff]
  %v1194 = vld [vmem:[%s1179 + $0x70] sm:$0xff]
  %v1195 = vld [vmem:[%s1179 + $0x78] sm:$0xff]
  %v1196 = vld [vmem:[%s1179 + $0x80] sm:$0xff]
  %v1197 = vld [vmem:[%s1179 + $0x88] sm:$0xff]
  %v1198 = vld [vmem:[%s1179 + $0x90] sm:$0xff]
  %v1199 = vld [vmem:[%s1179 + $0x98] sm:$0xff]
  %v1200 = vld [vmem:[%s1179 + $0xa0] sm:$0xff]
  %v1201 = vld [vmem:[%s1179 + $0xa8] sm:$0xff]
  %v1202 = vld [vmem:[%s1179 + $0xb0] sm:$0xff]
  %v1203 = vld [vmem:[%s1179 + $0xb8] sm:$0xff]
  %v1204 = vld [vmem:[%s1179 + $0xc0] sm:$0xff]
  %v1205 = vld [vmem:[%s1179 + $0xc8] sm:$0xff]
  %v1206 = vld [vmem:[%s1179 + $0xd0] sm:$0xff]
  %v1207 = vld [vmem:[%s1179 + $0xd8] sm:$0xff]
  %v1208 = vld [vmem:[%s1179 + $0xe0] sm:$0xff]
  %v1209 = vld [vmem:[%s1179 + $0xe8] sm:$0xff]
  %v1210 = vld [vmem:[%s1179 + $0xf0] sm:$0xff]
  %v1211 = vld [vmem:[%s1179 + $0xf8] sm:$0xff]
  %v1244 = vunpack.c.l.b16 %v1180
  %v1245 = vunpack.c.h.b16 %v1180
  %v1246 = vunpack.c.l.b16 %v1181
  %v1247 = vunpack.c.h.b16 %v1181
  %v1248 = vunpack.c.l.b16 %v1182
  %v1249 = vunpack.c.h.b16 %v1182
  %v1250 = vunpack.c.l.b16 %v1183
  %v1251 = vunpack.c.h.b16 %v1183
  %v1252 = vunpack.c.l.b16 %v1184
  %v1253 = vunpack.c.h.b16 %v1184
  %v1254 = vunpack.c.l.b16 %v1185
  %v1255 = vunpack.c.h.b16 %v1185
  %v1256 = vunpack.c.l.b16 %v1186
  %v1257 = vunpack.c.h.b16 %v1186
  %v1258 = vunpack.c.l.b16 %v1187
  %v1259 = vunpack.c.h.b16 %v1187
  %v1260 = vunpack.c.l.b16 %v1188
  %v1261 = vunpack.c.h.b16 %v1188
  %v1262 = vunpack.c.l.b16 %v1189
  %v1263 = vunpack.c.h.b16 %v1189
  %v1264 = vunpack.c.l.b16 %v1190
  %v1265 = vunpack.c.h.b16 %v1190
  %v1266 = vunpack.c.l.b16 %v1191
  %v1267 = vunpack.c.h.b16 %v1191
  %v1268 = vunpack.c.l.b16 %v1192
  %v1269 = vunpack.c.h.b16 %v1192
  %v1270 = vunpack.c.l.b16 %v1193
  %v1271 = vunpack.c.h.b16 %v1193
  %v1272 = vunpack.c.l.b16 %v1194
  %v1273 = vunpack.c.h.b16 %v1194
  %v1274 = vunpack.c.l.b16 %v1195
  %v1275 = vunpack.c.h.b16 %v1195
  %v1276 = vunpack.c.l.b16 %v1196
  %v1277 = vunpack.c.h.b16 %v1196
  %v1278 = vunpack.c.l.b16 %v1197
  %v1279 = vunpack.c.h.b16 %v1197
  %v1280 = vunpack.c.l.b16 %v1198
  %v1281 = vunpack.c.h.b16 %v1198
  %v1282 = vunpack.c.l.b16 %v1199
  %v1283 = vunpack.c.h.b16 %v1199
  %v1284 = vunpack.c.l.b16 %v1200
  %v1285 = vunpack.c.h.b16 %v1200
  %v1286 = vunpack.c.l.b16 %v1201
  %v1287 = vunpack.c.h.b16 %v1201
  %v1288 = vunpack.c.l.b16 %v1202
  %v1289 = vunpack.c.h.b16 %v1202
  %v1290 = vunpack.c.l.b16 %v1203
  %v1291 = vunpack.c.h.b16 %v1203
  %v1292 = vunpack.c.l.b16 %v1204
  %v1293 = vunpack.c.h.b16 %v1204
  %v1294 = vunpack.c.l.b16 %v1205
  %v1295 = vunpack.c.h.b16 %v1205
  %v1296 = vunpack.c.l.b16 %v1206
  %v1297 = vunpack.c.h.b16 %v1206
  %v1298 = vunpack.c.l.b16 %v1207
  %v1299 = vunpack.c.h.b16 %v1207
  %v1300 = vunpack.c.l.b16 %v1208
  %v1301 = vunpack.c.h.b16 %v1208
  %v1302 = vunpack.c.l.b16 %v1209
  %v1303 = vunpack.c.h.b16 %v1209
  %v1304 = vunpack.c.l.b16 %v1210
  %v1305 = vunpack.c.h.b16 %v1210
  %v1306 = vunpack.c.l.b16 %v1211
  %v1307 = vunpack.c.h.b16 %v1211
  %v1308 = vpack.c.b16 %v1246, %v1244
  %v1309 = vpack.c.b16 %v1247, %v1245
  %v1310 = vpack.c.b16 %v1250, %v1248
  %v1311 = vpack.c.b16 %v1251, %v1249
  %v1312 = vpack.c.b16 %v1254, %v1252
  %v1313 = vpack.c.b16 %v1255, %v1253
  %v1314 = vpack.c.b16 %v1258, %v1256
  %v1315 = vpack.c.b16 %v1259, %v1257
  %v1316 = vpack.c.b16 %v1262, %v1260
  %v1317 = vpack.c.b16 %v1263, %v1261
  %v1318 = vpack.c.b16 %v1266, %v1264
  %v1319 = vpack.c.b16 %v1267, %v1265
  %v1320 = vpack.c.b16 %v1270, %v1268
  %v1321 = vpack.c.b16 %v1271, %v1269
  %v1322 = vpack.c.b16 %v1274, %v1272
  %v1323 = vpack.c.b16 %v1275, %v1273
  %v1324 = vpack.c.b16 %v1278, %v1276
  %v1325 = vpack.c.b16 %v1279, %v1277
  %v1326 = vpack.c.b16 %v1282, %v1280
  %v1327 = vpack.c.b16 %v1283, %v1281
  %v1328 = vpack.c.b16 %v1286, %v1284
  %v1329 = vpack.c.b16 %v1287, %v1285
  %v1330 = vpack.c.b16 %v1290, %v1288
  %v1331 = vpack.c.b16 %v1291, %v1289
  %v1332 = vpack.c.b16 %v1294, %v1292
  %v1333 = vpack.c.b16 %v1295, %v1293
  %v1334 = vpack.c.b16 %v1298, %v1296
  %v1335 = vpack.c.b16 %v1299, %v1297
  %v1336 = vpack.c.b16 %v1302, %v1300
  %v1337 = vpack.c.b16 %v1303, %v1301
  %v1338 = vpack.c.b16 %v1306, %v1304
  %v1339 = vpack.c.b16 %v1307, %v1305
  %1372 = vmatprep.subr.bf16.mxu0 %v1309
  %1373 = vmatpush1.bf16.msra.mxu0 %v1308
  %1374 = vmatprep.subr.bf16.mxu0 %v1311
  %1375 = vmatpush1.bf16.msra.mxu0 %v1310
  %1376 = vmatprep.subr.bf16.mxu0 %v1313
  %1377 = vmatpush1.bf16.msra.mxu0 %v1312
  %1378 = vmatprep.subr.bf16.mxu0 %v1315
  %1379 = vmatpush1.bf16.msra.mxu0 %v1314
  %1380 = vmatprep.subr.bf16.mxu0 %v1317
  %1381 = vmatpush1.bf16.msra.mxu0 %v1316
  %1382 = vmatprep.subr.bf16.mxu0 %v1319
  %1383 = vmatpush1.bf16.msra.mxu0 %v1318
  %1384 = vmatprep.subr.bf16.mxu0 %v1321
  %1385 = vmatpush1.bf16.msra.mxu0 %v1320
  %1386 = vmatprep.subr.bf16.mxu0 %v1323
  %1387 = vmatpush1.bf16.msra.mxu0 %v1322
  %1388 = vmatprep.subr.bf16.mxu0 %v1325
  %1389 = vmatpush1.bf16.msra.mxu0 %v1324
  %1390 = vmatprep.subr.bf16.mxu0 %v1327
  %1391 = vmatpush1.bf16.msra.mxu0 %v1326
  %1392 = vmatprep.subr.bf16.mxu0 %v1329
  %1393 = vmatpush1.bf16.msra.mxu0 %v1328
  %1394 = vmatprep.subr.bf16.mxu0 %v1331
  %1395 = vmatpush1.bf16.msra.mxu0 %v1330
  %1396 = vmatprep.subr.bf16.mxu0 %v1333
  %1397 = vmatpush1.bf16.msra.mxu0 %v1332
  %1398 = vmatprep.subr.bf16.mxu0 %v1335
  %1399 = vmatpush1.bf16.msra.mxu0 %v1334
  %1400 = vmatprep.subr.bf16.mxu0 %v1337
  %1401 = vmatpush1.bf16.msra.mxu0 %v1336
  %1402 = vmatprep.subr.bf16.mxu0 %v1339
  %1403 = vmatpush1.bf16.msra.mxu0 %v1338
  %1404 = vmatprep.mubr.bf16.mxu0 %v1164
  %1405 = vmatmul.mubr.bf16.gmra.mrb[0].mxu0 %v1163
  %v1406 = vpop.f32.mrb[0].mxu0
  %v1407 = vadd.f32 0.0, %v1406
  %v1408 = vpop.f32.mrb[0].mxu0
  %v1409 = vadd.f32 0.0, %v1408
  %v1410 = vpop.f32.mrb[0].mxu0
  %v1411 = vadd.f32 0.0, %v1410
  %v1412 = vpop.f32.mrb[0].mxu0
  %v1413 = vadd.f32 0.0, %v1412
  %1414 = vmatprep.mubr.bf16.mxu0 %v1166
  %1415 = vmatmul.mubr.bf16.gmra.mrb[0].mxu0 %v1165
  %v1416 = vpop.f32.mrb[0].mxu0
  %v1417 = vadd.f32 0.0, %v1416
  %v1418 = vpop.f32.mrb[0].mxu0
  %v1419 = vadd.f32 0.0, %v1418
  %v1420 = vpop.f32.mrb[0].mxu0
  %v1421 = vadd.f32 0.0, %v1420
  %v1422 = vpop.f32.mrb[0].mxu0
  %v1423 = vadd.f32 0.0, %v1422
  %1424 = vmatprep.mubr.bf16.mxu0 %v1168
  %1425 = vmatmul.mubr.bf16.gmra.mrb[0].mxu0 %v1167
  %v1426 = vpop.f32.mrb[0].mxu0
  %v1427 = vadd.f32 0.0, %v1426
  %v1428 = vpop.f32.mrb[0].mxu0
  %v1429 = vadd.f32 0.0, %v1428
  %v1430 = vpop.f32.mrb[0].mxu0
  %v1431 = vadd.f32 0.0, %v1430
  %v1432 = vpop.f32.mrb[0].mxu0
  %v1433 = vadd.f32 0.0, %v1432
  %1434 = vmatprep.mubr.bf16.mxu0 %v1170
  %1435 = vmatmul.mubr.bf16.gmra.mrb[0].mxu0 %v1169
  %v1436 = vpop.f32.mrb[0].mxu0
  %v1437 = vadd.f32 0.0, %v1436
  %v1438 = vpop.f32.mrb[0].mxu0
  %v1439 = vadd.f32 0.0, %v1438
  %v1440 = vpop.f32.mrb[0].mxu0
  %v1441 = vadd.f32 0.0, %v1440
  %v1442 = vpop.f32.mrb[0].mxu0
  %v1443 = vadd.f32 0.0, %v1442
  %1444 = vmatprep.mubr.bf16.mxu0 %v1172
  %1445 = vmatmul.mubr.bf16.gmra.mrb[0].mxu0 %v1171
  %v1446 = vpop.f32.mrb[0].mxu0
  %v1447 = vadd.f32 0.0, %v1446
  %v1448 = vpop.f32.mrb[0].mxu0
  %v1449 = vadd.f32 0.0, %v1448
  %v1450 = vpop.f32.mrb[0].mxu0
  %v1451 = vadd.f32 0.0, %v1450
  %v1452 = vpop.f32.mrb[0].mxu0
  %v1453 = vadd.f32 0.0, %v1452
  %1454 = vmatprep.mubr.bf16.mxu0 %v1174
  %1455 = vmatmul.mubr.bf16.gmra.mrb[0].mxu0 %v1173
  %v1456 = vpop.f32.mrb[0].mxu0
  %v1457 = vadd.f32 0.0, %v1456
  %v1458 = vpop.f32.mrb[0].mxu0
  %v1459 = vadd.f32 0.0, %v1458
  %v1460 = vpop.f32.mrb[0].mxu0
  %v1461 = vadd.f32 0.0, %v1460
  %v1462 = vpop.f32.mrb[0].mxu0
  %v1463 = vadd.f32 0.0, %v1462
  %1464 = vmatprep.mubr.bf16.mxu0 %v1176
  %1465 = vmatmul.mubr.bf16.gmra.mrb[0].mxu0 %v1175
  %v1466 = vpop.f32.mrb[0].mxu0
  %v1467 = vadd.f32 0.0, %v1466
  %v1468 = vpop.f32.mrb[0].mxu0
  %v1469 = vadd.f32 0.0, %v1468
  %v1470 = vpop.f32.mrb[0].mxu0
  %v1471 = vadd.f32 0.0, %v1470
  %v1472 = vpop.f32.mrb[0].mxu0
  %v1473 = vadd.f32 0.0, %v1472
  %1474 = vmatprep.mubr.bf16.mxu0 %v1178
  %1475 = vmatmul.mubr.bf16.gmra.mrb[0].mxu0 %v1177
  %v1476 = vpop.f32.mrb[0].mxu0
  %v1477 = vadd.f32 0.0, %v1476
  %v1478 = vpop.f32.mrb[0].mxu0
  %v1479 = vadd.f32 0.0, %v1478
  %v1480 = vpop.f32.mrb[0].mxu0
  %v1481 = vadd.f32 0.0, %v1480
  %v1482 = vpop.f32.mrb[0].mxu0
  %v1483 = vadd.f32 0.0, %v1482
  %1484 = vdwg.mxu0
  %v1485 = vxor.u32 %v1407, 2147483648
  %v1486 = vxor.u32 %v1411, 2147483648
  %v1487 = vxor.u32 %v1417, 2147483648
  %v1488 = vxor.u32 %v1421, 2147483648
  %v1489 = vxor.u32 %v1427, 2147483648
  %v1490 = vxor.u32 %v1431, 2147483648
  %v1491 = vxor.u32 %v1437, 2147483648
  %v1492 = vxor.u32 %v1441, 2147483648
  %v1493 = vxor.u32 %v1447, 2147483648
  %v1494 = vxor.u32 %v1451, 2147483648
  %v1495 = vxor.u32 %v1457, 2147483648
  %v1496 = vxor.u32 %v1461, 2147483648
  %v1497 = vxor.u32 %v1467, 2147483648
  %v1498 = vxor.u32 %v1471, 2147483648
  %v1499 = vxor.u32 %v1477, 2147483648
  %v1500 = vxor.u32 %v1481, 2147483648
  %v1501 = vmul.f32 %v1485, 1.442695
  %v1502 = vpow.pop %v1501
  %v1503 = vmul.f32 %v1486, 1.442695
  %v1504 = vpow.pop %v1503
  %v1505 = vmul.f32 %v1487, 1.442695
  %v1506 = vpow.pop %v1505
  %v1507 = vmul.f32 %v1488, 1.442695
  %v1508 = vpow.pop %v1507
  %v1509 = vmul.f32 %v1489, 1.442695
  %v1510 = vpow.pop %v1509
  %v1511 = vmul.f32 %v1490, 1.442695
  %v1512 = vpow.pop %v1511
  %v1513 = vmul.f32 %v1491, 1.442695
  %v1514 = vpow.pop %v1513
  %v1515 = vmul.f32 %v1492, 1.442695
  %v1516 = vpow.pop %v1515
  %v1517 = vmul.f32 %v1493, 1.442695
  %v1518 = vpow.pop %v1517
  %v1519 = vmul.f32 %v1494, 1.442695
  %v1520 = vpow.pop %v1519
  %v1521 = vmul.f32 %v1495, 1.442695
  %v1522 = vpow.pop %v1521
  %v1523 = vmul.f32 %v1496, 1.442695
  %v1524 = vpow.pop %v1523
  %v1525 = vmul.f32 %v1497, 1.442695
  %v1526 = vpow.pop %v1525
  %v1527 = vmul.f32 %v1498, 1.442695
  %v1528 = vpow.pop %v1527
  %v1529 = vmul.f32 %v1499, 1.442695
  %v1530 = vpow.pop %v1529
  %v1531 = vmul.f32 %v1500, 1.442695
  %v1532 = vpow.pop %v1531
  %v1533 = vadd.f32 %v1502, 1.0
  %v1534 = vadd.f32 %v1504, 1.0
  %v1535 = vadd.f32 %v1506, 1.0
  %v1536 = vadd.f32 %v1508, 1.0
  %v1537 = vadd.f32 %v1510, 1.0
  %v1538 = vadd.f32 %v1512, 1.0
  %v1539 = vadd.f32 %v1514, 1.0
  %v1540 = vadd.f32 %v1516, 1.0
  %v1541 = vadd.f32 %v1518, 1.0
  %v1542 = vadd.f32 %v1520, 1.0
  %v1543 = vadd.f32 %v1522, 1.0
  %v1544 = vadd.f32 %v1524, 1.0
  %v1545 = vadd.f32 %v1526, 1.0
  %v1546 = vadd.f32 %v1528, 1.0
  %v1547 = vadd.f32 %v1530, 1.0
  %v1548 = vadd.f32 %v1532, 1.0
  %v1549 = vrcp.pop %v1533
  %v1550 = vmul.f32 1.0, %v1549
  %v1551 = vrcp.pop %v1534
  %v1552 = vmul.f32 1.0, %v1551
  %v1553 = vrcp.pop %v1535
  %v1554 = vmul.f32 1.0, %v1553
  %v1555 = vrcp.pop %v1536
  %v1556 = vmul.f32 1.0, %v1555
  %v1557 = vrcp.pop %v1537
  %v1558 = vmul.f32 1.0, %v1557
  %v1559 = vrcp.pop %v1538
  %v1560 = vmul.f32 1.0, %v1559
  %v1561 = vrcp.pop %v1539
  %v1562 = vmul.f32 1.0, %v1561
  %v1563 = vrcp.pop %v1540
  %v1564 = vmul.f32 1.0, %v1563
  %v1565 = vrcp.pop %v1541
  %v1566 = vmul.f32 1.0, %v1565
  %v1567 = vrcp.pop %v1542
  %v1568 = vmul.f32 1.0, %v1567
  %v1569 = vrcp.pop %v1543
  %v1570 = vmul.f32 1.0, %v1569
  %v1571 = vrcp.pop %v1544
  %v1572 = vmul.f32 1.0, %v1571
  %v1573 = vrcp.pop %v1545
  %v1574 = vmul.f32 1.0, %v1573
  %v1575 = vrcp.pop %v1546
  %v1576 = vmul.f32 1.0, %v1575
  %v1577 = vrcp.pop %v1547
  %v1578 = vmul.f32 1.0, %v1577
  %v1579 = vrcp.pop %v1548
  %v1580 = vmul.f32 1.0, %v1579
  %v1581 = vmul.f32 %v1407, %v1550
  %v1582 = vmul.f32 %v1411, %v1552
  %v1583 = vmul.f32 %v1417, %v1554
  %v1584 = vmul.f32 %v1421, %v1556
  %v1585 = vmul.f32 %v1427, %v1558
  %v1586 = vmul.f32 %v1431, %v1560
  %v1587 = vmul.f32 %v1437, %v1562
  %v1588 = vmul.f32 %v1441, %v1564
  %v1589 = vmul.f32 %v1447, %v1566
  %v1590 = vmul.f32 %v1451, %v1568
  %v1591 = vmul.f32 %v1457, %v1570
  %v1592 = vmul.f32 %v1461, %v1572
  %v1593 = vmul.f32 %v1467, %v1574
  %v1594 = vmul.f32 %v1471, %v1576
  %v1595 = vmul.f32 %v1477, %v1578
  %v1596 = vmul.f32 %v1481, %v1580
  %v1597 = vmul.f32 %v1581, %v1409
  %v1598 = vmul.f32 %v1582, %v1413
  %v1599 = vmul.f32 %v1583, %v1419
  %v1600 = vmul.f32 %v1584, %v1423
  %v1601 = vmul.f32 %v1585, %v1429
  %v1602 = vmul.f32 %v1586, %v1433
  %v1603 = vmul.f32 %v1587, %v1439
  %v1604 = vmul.f32 %v1588, %v1443
  %v1605 = vmul.f32 %v1589, %v1449
  %v1606 = vmul.f32 %v1590, %v1453
  %v1607 = vmul.f32 %v1591, %v1459
  %v1608 = vmul.f32 %v1592, %v1463
  %v1609 = vmul.f32 %v1593, %v1469
  %v1610 = vmul.f32 %v1594, %v1473
  %v1611 = vmul.f32 %v1595, %v1479
  %v1612 = vmul.f32 %v1596, %v1483
  %v1613 = vpack.c.bf16 %v1598, %v1597
  %v1614 = vpack.c.bf16 %v1600, %v1599
  %v1615 = vpack.c.bf16 %v1602, %v1601
  %v1616 = vpack.c.bf16 %v1604, %v1603
  %v1617 = vpack.c.bf16 %v1606, %v1605
  %v1618 = vpack.c.bf16 %v1608, %v1607
  %v1619 = vpack.c.bf16 %v1610, %v1609
  %v1620 = vpack.c.bf16 %v1612, %v1611
  %s1621 = scalar_lea.vmem %s3, 128
  %v1622 = vld [vmem:[%s1621] sm:$0xff]
  %v1623 = vld [vmem:[%s1621 + $0x8] sm:$0xff]
  %v1624 = vld [vmem:[%s1621 + $0x10] sm:$0xff]
  %v1625 = vld [vmem:[%s1621 + $0x18] sm:$0xff]
  %v1626 = vld [vmem:[%s1621 + $0x20] sm:$0xff]
  %v1627 = vld [vmem:[%s1621 + $0x28] sm:$0xff]
  %v1628 = vld [vmem:[%s1621 + $0x30] sm:$0xff]
  %v1629 = vld [vmem:[%s1621 + $0x38] sm:$0xff]
  %v1630 = vld [vmem:[%s1621 + $0x40] sm:$0xff]
  %v1631 = vld [vmem:[%s1621 + $0x48] sm:$0xff]
  %v1632 = vld [vmem:[%s1621 + $0x50] sm:$0xff]
  %v1633 = vld [vmem:[%s1621 + $0x58] sm:$0xff]
  %v1634 = vld [vmem:[%s1621 + $0x60] sm:$0xff]
  %v1635 = vld [vmem:[%s1621 + $0x68] sm:$0xff]
  %v1636 = vld [vmem:[%s1621 + $0x70] sm:$0xff]
  %v1637 = vld [vmem:[%s1621 + $0x78] sm:$0xff]
  %v1654 = vunpack.c.l.b16 %v1622
  %v1655 = vunpack.c.h.b16 %v1622
  %v1656 = vunpack.c.l.b16 %v1623
  %v1657 = vunpack.c.h.b16 %v1623
  %v1658 = vunpack.c.l.b16 %v1624
  %v1659 = vunpack.c.h.b16 %v1624
  %v1660 = vunpack.c.l.b16 %v1625
  %v1661 = vunpack.c.h.b16 %v1625
  %v1662 = vunpack.c.l.b16 %v1626
  %v1663 = vunpack.c.h.b16 %v1626
  %v1664 = vunpack.c.l.b16 %v1627
  %v1665 = vunpack.c.h.b16 %v1627
  %v1666 = vunpack.c.l.b16 %v1628
  %v1667 = vunpack.c.h.b16 %v1628
  %v1668 = vunpack.c.l.b16 %v1629
  %v1669 = vunpack.c.h.b16 %v1629
  %v1670 = vunpack.c.l.b16 %v1630
  %v1671 = vunpack.c.h.b16 %v1630
  %v1672 = vunpack.c.l.b16 %v1631
  %v1673 = vunpack.c.h.b16 %v1631
  %v1674 = vunpack.c.l.b16 %v1632
  %v1675 = vunpack.c.h.b16 %v1632
  %v1676 = vunpack.c.l.b16 %v1633
  %v1677 = vunpack.c.h.b16 %v1633
  %v1678 = vunpack.c.l.b16 %v1634
  %v1679 = vunpack.c.h.b16 %v1634
  %v1680 = vunpack.c.l.b16 %v1635
  %v1681 = vunpack.c.h.b16 %v1635
  %v1682 = vunpack.c.l.b16 %v1636
  %v1683 = vunpack.c.h.b16 %v1636
  %v1684 = vunpack.c.l.b16 %v1637
  %v1685 = vunpack.c.h.b16 %v1637
  %v1686 = vpack.c.b16 %v1656, %v1654
  %v1687 = vpack.c.b16 %v1657, %v1655
  %v1688 = vpack.c.b16 %v1660, %v1658
  %v1689 = vpack.c.b16 %v1661, %v1659
  %v1690 = vpack.c.b16 %v1664, %v1662
  %v1691 = vpack.c.b16 %v1665, %v1663
  %v1692 = vpack.c.b16 %v1668, %v1666
  %v1693 = vpack.c.b16 %v1669, %v1667
  %v1694 = vpack.c.b16 %v1672, %v1670
  %v1695 = vpack.c.b16 %v1673, %v1671
  %v1696 = vpack.c.b16 %v1676, %v1674
  %v1697 = vpack.c.b16 %v1677, %v1675
  %v1698 = vpack.c.b16 %v1680, %v1678
  %v1699 = vpack.c.b16 %v1681, %v1679
  %v1700 = vpack.c.b16 %v1684, %v1682
  %v1701 = vpack.c.b16 %v1685, %v1683
  %1718 = vmatprep.subr.bf16.mxu0 %v1687
  %1719 = vmatpush1.bf16.msra.mxu0 %v1686
  %1720 = vmatprep.subr.bf16.mxu0 %v1689
  %1721 = vmatpush1.bf16.msra.mxu0 %v1688
  %1722 = vmatprep.subr.bf16.mxu0 %v1691
  %1723 = vmatpush1.bf16.msra.mxu0 %v1690
  %1724 = vmatprep.subr.bf16.mxu0 %v1693
  %1725 = vmatpush1.bf16.msra.mxu0 %v1692
  %1726 = vmatprep.subr.bf16.mxu0 %v1695
  %1727 = vmatpush1.bf16.msra.mxu0 %v1694
  %1728 = vmatprep.subr.bf16.mxu0 %v1697
  %1729 = vmatpush1.bf16.msra.mxu0 %v1696
  %1730 = vmatprep.subr.bf16.mxu0 %v1699
  %1731 = vmatpush1.bf16.msra.mxu0 %v1698
  %1732 = vmatprep.subr.bf16.mxu0 %v1701
  %1733 = vmatpush1.bf16.msra.mxu0 %v1700
  %1734 = vmatprep.subr.bf16.mxu0 0
  %1735 = vmatpush1.bf16.msra.mxu0 0
  %1736 = vmatprep.subr.bf16.mxu0 0
  %1737 = vmatpush1.bf16.msra.mxu0 0
  %1738 = vmatprep.subr.bf16.mxu0 0
  %1739 = vmatpush1.bf16.msra.mxu0 0
  %1740 = vmatprep.subr.bf16.mxu0 0
  %1741 = vmatpush1.bf16.msra.mxu0 0
  %1742 = vmatprep.subr.bf16.mxu0 0
  %1743 = vmatpush1.bf16.msra.mxu0 0
  %1744 = vmatprep.subr.bf16.mxu0 0
  %1745 = vmatpush1.bf16.msra.mxu0 0
  %1746 = vmatprep.subr.bf16.mxu0 0
  %1747 = vmatpush1.bf16.msra.mxu0 0
  %1748 = vmatprep.subr.bf16.mxu0 0
  %1749 = vmatpush1.bf16.msra.mxu0 0
  %1750 = vmatprep.mubr.bf16.mxu0 0
  %1751 = vmatmul.mubr.bf16.gmra.mrb[0].mxu0 %v1613
  %v1752 = vpop.f32.mrb[0].mxu0
  %v1753 = vadd.f32 0.0, %v1752
  %v1754 = vpop.f32.mrb[0].mxu0
  %v1755 = vadd.f32 0.0, %v1754
  %v1756 = vpop.f32.mrb[0].mxu0
  %v1757 = vadd.f32 0.0, %v1756
  %v1758 = vpop.f32.mrb[0].mxu0
  %v1759 = vadd.f32 0.0, %v1758
  %1760 = vmatprep.mubr.bf16.mxu0 0
  %1761 = vmatmul.mubr.bf16.gmra.mrb[0].mxu0 %v1614
  %v1762 = vpop.f32.mrb[0].mxu0
  %v1763 = vadd.f32 0.0, %v1762
  %v1764 = vpop.f32.mrb[0].mxu0
  %v1765 = vadd.f32 0.0, %v1764
  %v1766 = vpop.f32.mrb[0].mxu0
  %v1767 = vadd.f32 0.0, %v1766
  %v1768 = vpop.f32.mrb[0].mxu0
  %v1769 = vadd.f32 0.0, %v1768
  %1770 = vmatprep.mubr.bf16.mxu0 0
  %1771 = vmatmul.mubr.bf16.gmra.mrb[0].mxu0 %v1615
  %v1772 = vpop.f32.mrb[0].mxu0
  %v1773 = vadd.f32 0.0, %v1772
  %v1774 = vpop.f32.mrb[0].mxu0
  %v1775 = vadd.f32 0.0, %v1774
  %v1776 = vpop.f32.mrb[0].mxu0
  %v1777 = vadd.f32 0.0, %v1776
  %v1778 = vpop.f32.mrb[0].mxu0
  %v1779 = vadd.f32 0.0, %v1778
  %1780 = vmatprep.mubr.bf16.mxu0 0
  %1781 = vmatmul.mubr.bf16.gmra.mrb[0].mxu0 %v1616
  %v1782 = vpop.f32.mrb[0].mxu0
  %v1783 = vadd.f32 0.0, %v1782
  %v1784 = vpop.f32.mrb[0].mxu0
  %v1785 = vadd.f32 0.0, %v1784
  %v1786 = vpop.f32.mrb[0].mxu0
  %v1787 = vadd.f32 0.0, %v1786
  %v1788 = vpop.f32.mrb[0].mxu0
  %v1789 = vadd.f32 0.0, %v1788
  %1790 = vmatprep.mubr.bf16.mxu0 0
  %1791 = vmatmul.mubr.bf16.gmra.mrb[0].mxu0 %v1617
  %v1792 = vpop.f32.mrb[0].mxu0
  %v1793 = vadd.f32 0.0, %v1792
  %v1794 = vpop.f32.mrb[0].mxu0
  %v1795 = vadd.f32 0.0, %v1794
  %v1796 = vpop.f32.mrb[0].mxu0
  %v1797 = vadd.f32 0.0, %v1796
  %v1798 = vpop.f32.mrb[0].mxu0
  %v1799 = vadd.f32 0.0, %v1798
  %1800 = vmatprep.mubr.bf16.mxu0 0
  %1801 = vmatmul.mubr.bf16.gmra.mrb[0].mxu0 %v1618
  %v1802 = vpop.f32.mrb[0].mxu0
  %v1803 = vadd.f32 0.0, %v1802
  %v1804 = vpop.f32.mrb[0].mxu0
  %v1805 = vadd.f32 0.0, %v1804
  %v1806 = vpop.f32.mrb[0].mxu0
  %v1807 = vadd.f32 0.0, %v1806
  %v1808 = vpop.f32.mrb[0].mxu0
  %v1809 = vadd.f32 0.0, %v1808
  %1810 = vmatprep.mubr.bf16.mxu0 0
  %1811 = vmatmul.mubr.bf16.gmra.mrb[0].mxu0 %v1619
  %v1812 = vpop.f32.mrb[0].mxu0
  %v1813 = vadd.f32 0.0, %v1812
  %v1814 = vpop.f32.mrb[0].mxu0
  %v1815 = vadd.f32 0.0, %v1814
  %v1816 = vpop.f32.mrb[0].mxu0
  %v1817 = vadd.f32 0.0, %v1816
  %v1818 = vpop.f32.mrb[0].mxu0
  %v1819 = vadd.f32 0.0, %v1818
  %1820 = vmatprep.mubr.bf16.mxu0 0
  %1821 = vmatmul.mubr.bf16.gmra.mrb[0].mxu0 %v1620
  %v1822 = vpop.f32.mrb[0].mxu0
  %v1823 = vadd.f32 0.0, %v1822
  %v1824 = vpop.f32.mrb[0].mxu0
  %v1825 = vadd.f32 0.0, %v1824
  %v1826 = vpop.f32.mrb[0].mxu0
  %v1827 = vadd.f32 0.0, %v1826
  %v1828 = vpop.f32.mrb[0].mxu0
  %v1829 = vadd.f32 0.0, %v1828
  %1830 = vdwg.mxu0
  %v1831 = vadd.f32 %v926, %v1753
  %v1832 = vadd.f32 %v927, %v1755
  %v1833 = vadd.f32 %v928, %v1757
  %v1834 = vadd.f32 %v929, %v1759
  %v1835 = vadd.f32 %v930, %v1763
  %v1836 = vadd.f32 %v931, %v1765
  %v1837 = vadd.f32 %v932, %v1767
  %v1838 = vadd.f32 %v933, %v1769
  %v1839 = vadd.f32 %v934, %v1773
  %v1840 = vadd.f32 %v935, %v1775
  %v1841 = vadd.f32 %v936, %v1777
  %v1842 = vadd.f32 %v937, %v1779
  %v1843 = vadd.f32 %v938, %v1783
  %v1844 = vadd.f32 %v939, %v1785
  %v1845 = vadd.f32 %v940, %v1787
  %v1846 = vadd.f32 %v941, %v1789
  %v1847 = vadd.f32 %v942, %v1793
  %v1848 = vadd.f32 %v943, %v1795
  %v1849 = vadd.f32 %v944, %v1797
  %v1850 = vadd.f32 %v945, %v1799
  %v1851 = vadd.f32 %v946, %v1803
  %v1852 = vadd.f32 %v947, %v1805
  %v1853 = vadd.f32 %v948, %v1807
  %v1854 = vadd.f32 %v949, %v1809
  %v1855 = vadd.f32 %v950, %v1813
  %v1856 = vadd.f32 %v951, %v1815
  %v1857 = vadd.f32 %v952, %v1817
  %v1858 = vadd.f32 %v953, %v1819
  %v1859 = vadd.f32 %v954, %v1823
  %v1860 = vadd.f32 %v955, %v1825
  %v1861 = vadd.f32 %v956, %v1827
  %v1862 = vadd.f32 %v957, %v1829
  %s1863 = scalar_lea.vmem %s1, 4
  %v1864 = vld [vmem:[%s1863] sm:$0x3]
  %v1865 = vmul.f32 %v1831, %v1831
  %v1866 = vmul.f32 %v1832, %v1832
  %v1867 = vmul.f32 %v1833, %v1833
  %v1868 = vmul.f32 %v1834, %v1834
  %v1869 = vmul.f32 %v1835, %v1835
  %v1870 = vmul.f32 %v1836, %v1836
  %v1871 = vmul.f32 %v1837, %v1837
  %v1872 = vmul.f32 %v1838, %v1838
  %v1873 = vmul.f32 %v1839, %v1839
  %v1874 = vmul.f32 %v1840, %v1840
  %v1875 = vmul.f32 %v1841, %v1841
  %v1876 = vmul.f32 %v1842, %v1842
  %v1877 = vmul.f32 %v1843, %v1843
  %v1878 = vmul.f32 %v1844, %v1844
  %v1879 = vmul.f32 %v1845, %v1845
  %v1880 = vmul.f32 %v1846, %v1846
  %v1881 = vmul.f32 %v1847, %v1847
  %v1882 = vmul.f32 %v1848, %v1848
  %v1883 = vmul.f32 %v1849, %v1849
  %v1884 = vmul.f32 %v1850, %v1850
  %v1885 = vmul.f32 %v1851, %v1851
  %v1886 = vmul.f32 %v1852, %v1852
  %v1887 = vmul.f32 %v1853, %v1853
  %v1888 = vmul.f32 %v1854, %v1854
  %v1889 = vmul.f32 %v1855, %v1855
  %v1890 = vmul.f32 %v1856, %v1856
  %v1891 = vmul.f32 %v1857, %v1857
  %v1892 = vmul.f32 %v1858, %v1858
  %v1893 = vmul.f32 %v1859, %v1859
  %v1894 = vmul.f32 %v1860, %v1860
  %v1895 = vmul.f32 %v1861, %v1861
  %v1896 = vmul.f32 %v1862, %v1862
  %v1897 = vadd.f32 %v1865, %v1866
  %1898 = vadd.xlane.f32.xlu0 %v1897
  %v1899 = vpop.xlane.xlu0 %1898
  %v1900 = vadd.f32 %v1867, %v1868
  %1901 = vadd.xlane.f32.xlu0 %v1900
  %v1902 = vpop.xlane.xlu0 %1901
  %v1903 = vadd.f32 %v1869, %v1870
  %1904 = vadd.xlane.f32.xlu0 %v1903
  %v1905 = vpop.xlane.xlu0 %1904
  %v1906 = vadd.f32 %v1871, %v1872
  %1907 = vadd.xlane.f32.xlu0 %v1906
  %v1908 = vpop.xlane.xlu0 %1907
  %v1909 = vadd.f32 %v1873, %v1874
  %1910 = vadd.xlane.f32.xlu0 %v1909
  %v1911 = vpop.xlane.xlu0 %1910
  %v1912 = vadd.f32 %v1875, %v1876
  %1913 = vadd.xlane.f32.xlu0 %v1912
  %v1914 = vpop.xlane.xlu0 %1913
  %v1915 = vadd.f32 %v1877, %v1878
  %1916 = vadd.xlane.f32.xlu0 %v1915
  %v1917 = vpop.xlane.xlu0 %1916
  %v1918 = vadd.f32 %v1879, %v1880
  %1919 = vadd.xlane.f32.xlu0 %v1918
  %v1920 = vpop.xlane.xlu0 %1919
  %v1921 = vadd.f32 %v1881, %v1882
  %1922 = vadd.xlane.f32.xlu0 %v1921
  %v1923 = vpop.xlane.xlu0 %1922
  %v1924 = vadd.f32 %v1883, %v1884
  %1925 = vadd.xlane.f32.xlu0 %v1924
  %v1926 = vpop.xlane.xlu0 %1925
  %v1927 = vadd.f32 %v1885, %v1886
  %1928 = vadd.xlane.f32.xlu0 %v1927
  %v1929 = vpop.xlane.xlu0 %1928
  %v1930 = vadd.f32 %v1887, %v1888
  %1931 = vadd.xlane.f32.xlu0 %v1930
  %v1932 = vpop.xlane.xlu0 %1931
  %v1933 = vadd.f32 %v1889, %v1890
  %1934 = vadd.xlane.f32.xlu0 %v1933
  %v1935 = vpop.xlane.xlu0 %1934
  %v1936 = vadd.f32 %v1891, %v1892
  %1937 = vadd.xlane.f32.xlu0 %v1936
  %v1938 = vpop.xlane.xlu0 %1937
  %v1939 = vadd.f32 %v1893, %v1894
  %1940 = vadd.xlane.f32.xlu0 %v1939
  %v1941 = vpop.xlane.xlu0 %1940
  %v1942 = vadd.f32 %v1895, %v1896
  %1943 = vadd.xlane.f32.xlu0 %v1942
  %v1944 = vpop.xlane.xlu0 %1943
  %v1945 = vmul.f32 %v1899, 0.0052083335
  %v1946 = vmul.f32 %v1902, 0.0052083335
  %v1947 = vmul.f32 %v1905, 0.0052083335
  %v1948 = vmul.f32 %v1908, 0.0052083335
  %v1949 = vmul.f32 %v1911, 0.0052083335
  %v1950 = vmul.f32 %v1914, 0.0052083335
  %v1951 = vmul.f32 %v1917, 0.0052083335
  %v1952 = vmul.f32 %v1920, 0.0052083335
  %v1953 = vmul.f32 %v1923, 0.0052083335
  %v1954 = vmul.f32 %v1926, 0.0052083335
  %v1955 = vmul.f32 %v1929, 0.0052083335
  %v1956 = vmul.f32 %v1932, 0.0052083335
  %v1957 = vmul.f32 %v1935, 0.0052083335
  %v1958 = vmul.f32 %v1938, 0.0052083335
  %v1959 = vmul.f32 %v1941, 0.0052083335
  %v1960 = vmul.f32 %v1944, 0.0052083335
  %v1961 = vadd.f32 %v1945, 1e-05
  %v1962 = vadd.f32 %v1946, 1e-05
  %v1963 = vadd.f32 %v1947, 1e-05
  %v1964 = vadd.f32 %v1948, 1e-05
  %v1965 = vadd.f32 %v1949, 1e-05
  %v1966 = vadd.f32 %v1950, 1e-05
  %v1967 = vadd.f32 %v1951, 1e-05
  %v1968 = vadd.f32 %v1952, 1e-05
  %v1969 = vadd.f32 %v1953, 1e-05
  %v1970 = vadd.f32 %v1954, 1e-05
  %v1971 = vadd.f32 %v1955, 1e-05
  %v1972 = vadd.f32 %v1956, 1e-05
  %v1973 = vadd.f32 %v1957, 1e-05
  %v1974 = vadd.f32 %v1958, 1e-05
  %v1975 = vadd.f32 %v1959, 1e-05
  %v1976 = vadd.f32 %v1960, 1e-05
  %v1977 = vrsqrt.pop %v1961
  %v1978 = vrsqrt.pop %v1962
  %v1979 = vrsqrt.pop %v1963
  %v1980 = vrsqrt.pop %v1964
  %v1981 = vrsqrt.pop %v1965
  %v1982 = vrsqrt.pop %v1966
  %v1983 = vrsqrt.pop %v1967
  %v1984 = vrsqrt.pop %v1968
  %v1985 = vrsqrt.pop %v1969
  %v1986 = vrsqrt.pop %v1970
  %v1987 = vrsqrt.pop %v1971
  %v1988 = vrsqrt.pop %v1972
  %v1989 = vrsqrt.pop %v1973
  %v1990 = vrsqrt.pop %v1974
  %v1991 = vrsqrt.pop %v1975
  %v1992 = vrsqrt.pop %v1976
  %v1993 = vmul.f32 %v1831, %v1977
  %v1994 = vmul.f32 %v1832, %v1977
  %v1995 = vmul.f32 %v1833, %v1978
  %v1996 = vmul.f32 %v1834, %v1978
  %v1997 = vmul.f32 %v1835, %v1979
  %v1998 = vmul.f32 %v1836, %v1979
  %v1999 = vmul.f32 %v1837, %v1980
  %v2000 = vmul.f32 %v1838, %v1980
  %v2001 = vmul.f32 %v1839, %v1981
  %v2002 = vmul.f32 %v1840, %v1981
  %v2003 = vmul.f32 %v1841, %v1982
  %v2004 = vmul.f32 %v1842, %v1982
  %v2005 = vmul.f32 %v1843, %v1983
  %v2006 = vmul.f32 %v1844, %v1983
  %v2007 = vmul.f32 %v1845, %v1984
  %v2008 = vmul.f32 %v1846, %v1984
  %v2009 = vmul.f32 %v1847, %v1985
  %v2010 = vmul.f32 %v1848, %v1985
  %v2011 = vmul.f32 %v1849, %v1986
  %v2012 = vmul.f32 %v1850, %v1986
  %v2013 = vmul.f32 %v1851, %v1987
  %v2014 = vmul.f32 %v1852, %v1987
  %v2015 = vmul.f32 %v1853, %v1988
  %v2016 = vmul.f32 %v1854, %v1988
  %v2017 = vmul.f32 %v1855, %v1989
  %v2018 = vmul.f32 %v1856, %v1989
  %v2019 = vmul.f32 %v1857, %v1990
  %v2020 = vmul.f32 %v1858, %v1990
  %v2021 = vmul.f32 %v1859, %v1991
  %v2022 = vmul.f32 %v1860, %v1991
  %v2023 = vmul.f32 %v1861, %v1992
  %v2024 = vmul.f32 %v1862, %v1992
  %v2026 = vlaneseq
  %v2027 = vshrl.u32 %v2026, 7
  %v2028 = vsub.s32 0, %v2027
  %v2029 = vrot.slane %v1864, %v2028
  %v2030 = vlaneseq
  %v2031 = vshrl.u32 %v2030, 7
  %v2032 = vsub.s32 1, %v2031
  %v2033 = vrot.slane %v1864, %v2032
  %v2036 = vmul.f32 %v1993, %v2029
  %v2037 = vmul.f32 %v1994, %v2033
  %v2038 = vmul.f32 %v1995, %v2029
  %v2039 = vmul.f32 %v1996, %v2033
  %v2040 = vmul.f32 %v1997, %v2029
  %v2041 = vmul.f32 %v1998, %v2033
  %v2042 = vmul.f32 %v1999, %v2029
  %v2043 = vmul.f32 %v2000, %v2033
  %v2044 = vmul.f32 %v2001, %v2029
  %v2045 = vmul.f32 %v2002, %v2033
  %v2046 = vmul.f32 %v2003, %v2029
  %v2047 = vmul.f32 %v2004, %v2033
  %v2048 = vmul.f32 %v2005, %v2029
  %v2049 = vmul.f32 %v2006, %v2033
  %v2050 = vmul.f32 %v2007, %v2029
  %v2051 = vmul.f32 %v2008, %v2033
  %v2052 = vmul.f32 %v2009, %v2029
  %v2053 = vmul.f32 %v2010, %v2033
  %v2054 = vmul.f32 %v2011, %v2029
  %v2055 = vmul.f32 %v2012, %v2033
  %v2056 = vmul.f32 %v2013, %v2029
  %v2057 = vmul.f32 %v2014, %v2033
  %v2058 = vmul.f32 %v2015, %v2029
  %v2059 = vmul.f32 %v2016, %v2033
  %v2060 = vmul.f32 %v2017, %v2029
  %v2061 = vmul.f32 %v2018, %v2033
  %v2062 = vmul.f32 %v2019, %v2029
  %v2063 = vmul.f32 %v2020, %v2033
  %v2064 = vmul.f32 %v2021, %v2029
  %v2065 = vmul.f32 %v2022, %v2033
  %v2066 = vmul.f32 %v2023, %v2029
  %v2067 = vmul.f32 %v2024, %v2033
  %v2068 = vpack.c.bf16 %v2038, %v2036
  %v2069 = vpack.c.bf16 %v2039, %v2037
  %v2070 = vpack.c.bf16 %v2042, %v2040
  %v2071 = vpack.c.bf16 %v2043, %v2041
  %v2072 = vpack.c.bf16 %v2046, %v2044
  %v2073 = vpack.c.bf16 %v2047, %v2045
  %v2074 = vpack.c.bf16 %v2050, %v2048
  %v2075 = vpack.c.bf16 %v2051, %v2049
  %v2076 = vpack.c.bf16 %v2054, %v2052
  %v2077 = vpack.c.bf16 %v2055, %v2053
  %v2078 = vpack.c.bf16 %v2058, %v2056
  %v2079 = vpack.c.bf16 %v2059, %v2057
  %v2080 = vpack.c.bf16 %v2062, %v2060
  %v2081 = vpack.c.bf16 %v2063, %v2061
  %v2082 = vpack.c.bf16 %v2066, %v2064
  %v2083 = vpack.c.bf16 %v2067, %v2065
  %s2084 = scalar_lea.vmem %s2, 512
  %v2085 = vld [vmem:[%s2084] sm:$0xff]
  %v2086 = vld [vmem:[%s2084 + $0x8] sm:$0xff]
  %v2087 = vld [vmem:[%s2084 + $0x10] sm:$0xff]
  %v2088 = vld [vmem:[%s2084 + $0x18] sm:$0xff]
  %v2089 = vld [vmem:[%s2084 + $0x20] sm:$0xff]
  %v2090 = vld [vmem:[%s2084 + $0x28] sm:$0xff]
  %v2091 = vld [vmem:[%s2084 + $0x30] sm:$0xff]
  %v2092 = vld [vmem:[%s2084 + $0x38] sm:$0xff]
  %v2093 = vld [vmem:[%s2084 + $0x40] sm:$0xff]
  %v2094 = vld [vmem:[%s2084 + $0x48] sm:$0xff]
  %v2095 = vld [vmem:[%s2084 + $0x50] sm:$0xff]
  %v2096 = vld [vmem:[%s2084 + $0x58] sm:$0xff]
  %v2097 = vld [vmem:[%s2084 + $0x60] sm:$0xff]
  %v2098 = vld [vmem:[%s2084 + $0x68] sm:$0xff]
  %v2099 = vld [vmem:[%s2084 + $0x70] sm:$0xff]
  %v2100 = vld [vmem:[%s2084 + $0x78] sm:$0xff]
  %v2101 = vld [vmem:[%s2084 + $0x80] sm:$0xff]
  %v2102 = vld [vmem:[%s2084 + $0x88] sm:$0xff]
  %v2103 = vld [vmem:[%s2084 + $0x90] sm:$0xff]
  %v2104 = vld [vmem:[%s2084 + $0x98] sm:$0xff]
  %v2105 = vld [vmem:[%s2084 + $0xa0] sm:$0xff]
  %v2106 = vld [vmem:[%s2084 + $0xa8] sm:$0xff]
  %v2107 = vld [vmem:[%s2084 + $0xb0] sm:$0xff]
  %v2108 = vld [vmem:[%s2084 + $0xb8] sm:$0xff]
  %v2109 = vld [vmem:[%s2084 + $0xc0] sm:$0xff]
  %v2110 = vld [vmem:[%s2084 + $0xc8] sm:$0xff]
  %v2111 = vld [vmem:[%s2084 + $0xd0] sm:$0xff]
  %v2112 = vld [vmem:[%s2084 + $0xd8] sm:$0xff]
  %v2113 = vld [vmem:[%s2084 + $0xe0] sm:$0xff]
  %v2114 = vld [vmem:[%s2084 + $0xe8] sm:$0xff]
  %v2115 = vld [vmem:[%s2084 + $0xf0] sm:$0xff]
  %v2116 = vld [vmem:[%s2084 + $0xf8] sm:$0xff]
  %v2149 = vunpack.c.l.b16 %v2085
  %v2150 = vunpack.c.h.b16 %v2085
  %v2151 = vunpack.c.l.b16 %v2086
  %v2152 = vunpack.c.h.b16 %v2086
  %v2153 = vunpack.c.l.b16 %v2087
  %v2154 = vunpack.c.h.b16 %v2087
  %v2155 = vunpack.c.l.b16 %v2088
  %v2156 = vunpack.c.h.b16 %v2088
  %v2157 = vunpack.c.l.b16 %v2089
  %v2158 = vunpack.c.h.b16 %v2089
  %v2159 = vunpack.c.l.b16 %v2090
  %v2160 = vunpack.c.h.b16 %v2090
  %v2161 = vunpack.c.l.b16 %v2091
  %v2162 = vunpack.c.h.b16 %v2091
  %v2163 = vunpack.c.l.b16 %v2092
  %v2164 = vunpack.c.h.b16 %v2092
  %v2165 = vunpack.c.l.b16 %v2093
  %v2166 = vunpack.c.h.b16 %v2093
  %v2167 = vunpack.c.l.b16 %v2094
  %v2168 = vunpack.c.h.b16 %v2094
  %v2169 = vunpack.c.l.b16 %v2095
  %v2170 = vunpack.c.h.b16 %v2095
  %v2171 = vunpack.c.l.b16 %v2096
  %v2172 = vunpack.c.h.b16 %v2096
  %v2173 = vunpack.c.l.b16 %v2097
  %v2174 = vunpack.c.h.b16 %v2097
  %v2175 = vunpack.c.l.b16 %v2098
  %v2176 = vunpack.c.h.b16 %v2098
  %v2177 = vunpack.c.l.b16 %v2099
  %v2178 = vunpack.c.h.b16 %v2099
  %v2179 = vunpack.c.l.b16 %v2100
  %v2180 = vunpack.c.h.b16 %v2100
  %v2181 = vunpack.c.l.b16 %v2101
  %v2182 = vunpack.c.h.b16 %v2101
  %v2183 = vunpack.c.l.b16 %v2102
  %v2184 = vunpack.c.h.b16 %v2102
  %v2185 = vunpack.c.l.b16 %v2103
  %v2186 = vunpack.c.h.b16 %v2103
  %v2187 = vunpack.c.l.b16 %v2104
  %v2188 = vunpack.c.h.b16 %v2104
  %v2189 = vunpack.c.l.b16 %v2105
  %v2190 = vunpack.c.h.b16 %v2105
  %v2191 = vunpack.c.l.b16 %v2106
  %v2192 = vunpack.c.h.b16 %v2106
  %v2193 = vunpack.c.l.b16 %v2107
  %v2194 = vunpack.c.h.b16 %v2107
  %v2195 = vunpack.c.l.b16 %v2108
  %v2196 = vunpack.c.h.b16 %v2108
  %v2197 = vunpack.c.l.b16 %v2109
  %v2198 = vunpack.c.h.b16 %v2109
  %v2199 = vunpack.c.l.b16 %v2110
  %v2200 = vunpack.c.h.b16 %v2110
  %v2201 = vunpack.c.l.b16 %v2111
  %v2202 = vunpack.c.h.b16 %v2111
  %v2203 = vunpack.c.l.b16 %v2112
  %v2204 = vunpack.c.h.b16 %v2112
  %v2205 = vunpack.c.l.b16 %v2113
  %v2206 = vunpack.c.h.b16 %v2113
  %v2207 = vunpack.c.l.b16 %v2114
  %v2208 = vunpack.c.h.b16 %v2114
  %v2209 = vunpack.c.l.b16 %v2115
  %v2210 = vunpack.c.h.b16 %v2115
  %v2211 = vunpack.c.l.b16 %v2116
  %v2212 = vunpack.c.h.b16 %v2116
  %v2213 = vpack.c.b16 %v2151, %v2149
  %v2214 = vpack.c.b16 %v2152, %v2150
  %v2215 = vpack.c.b16 %v2155, %v2153
  %v2216 = vpack.c.b16 %v2156, %v2154
  %v2217 = vpack.c.b16 %v2159, %v2157
  %v2218 = vpack.c.b16 %v2160, %v2158
  %v2219 = vpack.c.b16 %v2163, %v2161
  %v2220 = vpack.c.b16 %v2164, %v2162
  %v2221 = vpack.c.b16 %v2167, %v2165
  %v2222 = vpack.c.b16 %v2168, %v2166
  %v2223 = vpack.c.b16 %v2171, %v2169
  %v2224 = vpack.c.b16 %v2172, %v2170
  %v2225 = vpack.c.b16 %v2175, %v2173
  %v2226 = vpack.c.b16 %v2176, %v2174
  %v2227 = vpack.c.b16 %v2179, %v2177
  %v2228 = vpack.c.b16 %v2180, %v2178
  %v2229 = vpack.c.b16 %v2183, %v2181
  %v2230 = vpack.c.b16 %v2184, %v2182
  %v2231 = vpack.c.b16 %v2187, %v2185
  %v2232 = vpack.c.b16 %v2188, %v2186
  %v2233 = vpack.c.b16 %v2191, %v2189
  %v2234 = vpack.c.b16 %v2192, %v2190
  %v2235 = vpack.c.b16 %v2195, %v2193
  %v2236 = vpack.c.b16 %v2196, %v2194
  %v2237 = vpack.c.b16 %v2199, %v2197
  %v2238 = vpack.c.b16 %v2200, %v2198
  %v2239 = vpack.c.b16 %v2203, %v2201
  %v2240 = vpack.c.b16 %v2204, %v2202
  %v2241 = vpack.c.b16 %v2207, %v2205
  %v2242 = vpack.c.b16 %v2208, %v2206
  %v2243 = vpack.c.b16 %v2211, %v2209
  %v2244 = vpack.c.b16 %v2212, %v2210
  %2277 = vmatprep.subr.bf16.mxu0 %v2214
  %2278 = vmatpush1.bf16.msra.mxu0 %v2213
  %2279 = vmatprep.subr.bf16.mxu0 %v2216
  %2280 = vmatpush1.bf16.msra.mxu0 %v2215
  %2281 = vmatprep.subr.bf16.mxu0 %v2218
  %2282 = vmatpush1.bf16.msra.mxu0 %v2217
  %2283 = vmatprep.subr.bf16.mxu0 %v2220
  %2284 = vmatpush1.bf16.msra.mxu0 %v2219
  %2285 = vmatprep.subr.bf16.mxu0 %v2222
  %2286 = vmatpush1.bf16.msra.mxu0 %v2221
  %2287 = vmatprep.subr.bf16.mxu0 %v2224
  %2288 = vmatpush1.bf16.msra.mxu0 %v2223
  %2289 = vmatprep.subr.bf16.mxu0 %v2226
  %2290 = vmatpush1.bf16.msra.mxu0 %v2225
  %2291 = vmatprep.subr.bf16.mxu0 %v2228
  %2292 = vmatpush1.bf16.msra.mxu0 %v2227
  %2293 = vmatprep.subr.bf16.mxu0 %v2230
  %2294 = vmatpush1.bf16.msra.mxu0 %v2229
  %2295 = vmatprep.subr.bf16.mxu0 %v2232
  %2296 = vmatpush1.bf16.msra.mxu0 %v2231
  %2297 = vmatprep.subr.bf16.mxu0 %v2234
  %2298 = vmatpush1.bf16.msra.mxu0 %v2233
  %2299 = vmatprep.subr.bf16.mxu0 %v2236
  %2300 = vmatpush1.bf16.msra.mxu0 %v2235
  %2301 = vmatprep.subr.bf16.mxu0 %v2238
  %2302 = vmatpush1.bf16.msra.mxu0 %v2237
  %2303 = vmatprep.subr.bf16.mxu0 %v2240
  %2304 = vmatpush1.bf16.msra.mxu0 %v2239
  %2305 = vmatprep.subr.bf16.mxu0 %v2242
  %2306 = vmatpush1.bf16.msra.mxu0 %v2241
  %2307 = vmatprep.subr.bf16.mxu0 %v2244
  %2308 = vmatpush1.bf16.msra.mxu0 %v2243
  %2309 = vmatprep.mubr.bf16.mxu0 %v2069
  %2310 = vmatmul.mubr.bf16.gmra.mrb[0].mxu0 %v2068
  %v2311 = vpop.f32.mrb[0].mxu0
  %v2312 = vadd.f32 0.0, %v2311
  %v2313 = vpop.f32.mrb[0].mxu0
  %v2314 = vadd.f32 0.0, %v2313
  %v2315 = vpop.f32.mrb[0].mxu0
  %v2316 = vadd.f32 0.0, %v2315
  %v2317 = vpop.f32.mrb[0].mxu0
  %v2318 = vadd.f32 0.0, %v2317
  %2319 = vmatprep.mubr.bf16.mxu0 %v2071
  %2320 = vmatmul.mubr.bf16.gmra.mrb[0].mxu0 %v2070
  %v2321 = vpop.f32.mrb[0].mxu0
  %v2322 = vadd.f32 0.0, %v2321
  %v2323 = vpop.f32.mrb[0].mxu0
  %v2324 = vadd.f32 0.0, %v2323
  %v2325 = vpop.f32.mrb[0].mxu0
  %v2326 = vadd.f32 0.0, %v2325
  %v2327 = vpop.f32.mrb[0].mxu0
  %v2328 = vadd.f32 0.0, %v2327
  %2329 = vmatprep.mubr.bf16.mxu0 %v2073
  %2330 = vmatmul.mubr.bf16.gmra.mrb[0].mxu0 %v2072
  %v2331 = vpop.f32.mrb[0].mxu0
  %v2332 = vadd.f32 0.0, %v2331
  %v2333 = vpop.f32.mrb[0].mxu0
  %v2334 = vadd.f32 0.0, %v2333
  %v2335 = vpop.f32.mrb[0].mxu0
  %v2336 = vadd.f32 0.0, %v2335
  %v2337 = vpop.f32.mrb[0].mxu0
  %v2338 = vadd.f32 0.0, %v2337
  %2339 = vmatprep.mubr.bf16.mxu0 %v2075
  %2340 = vmatmul.mubr.bf16.gmra.mrb[0].mxu0 %v2074
  %v2341 = vpop.f32.mrb[0].mxu0
  %v2342 = vadd.f32 0.0, %v2341
  %v2343 = vpop.f32.mrb[0].mxu0
  %v2344 = vadd.f32 0.0, %v2343
  %v2345 = vpop.f32.mrb[0].mxu0
  %v2346 = vadd.f32 0.0, %v2345
  %v2347 = vpop.f32.mrb[0].mxu0
  %v2348 = vadd.f32 0.0, %v2347
  %2349 = vmatprep.mubr.bf16.mxu0 %v2077
  %2350 = vmatmul.mubr.bf16.gmra.mrb[0].mxu0 %v2076
  %v2351 = vpop.f32.mrb[0].mxu0
  %v2352 = vadd.f32 0.0, %v2351
  %v2353 = vpop.f32.mrb[0].mxu0
  %v2354 = vadd.f32 0.0, %v2353
  %v2355 = vpop.f32.mrb[0].mxu0
  %v2356 = vadd.f32 0.0, %v2355
  %v2357 = vpop.f32.mrb[0].mxu0
  %v2358 = vadd.f32 0.0, %v2357
  %2359 = vmatprep.mubr.bf16.mxu0 %v2079
  %2360 = vmatmul.mubr.bf16.gmra.mrb[0].mxu0 %v2078
  %v2361 = vpop.f32.mrb[0].mxu0
  %v2362 = vadd.f32 0.0, %v2361
  %v2363 = vpop.f32.mrb[0].mxu0
  %v2364 = vadd.f32 0.0, %v2363
  %v2365 = vpop.f32.mrb[0].mxu0
  %v2366 = vadd.f32 0.0, %v2365
  %v2367 = vpop.f32.mrb[0].mxu0
  %v2368 = vadd.f32 0.0, %v2367
  %2369 = vmatprep.mubr.bf16.mxu0 %v2081
  %2370 = vmatmul.mubr.bf16.gmra.mrb[0].mxu0 %v2080
  %v2371 = vpop.f32.mrb[0].mxu0
  %v2372 = vadd.f32 0.0, %v2371
  %v2373 = vpop.f32.mrb[0].mxu0
  %v2374 = vadd.f32 0.0, %v2373
  %v2375 = vpop.f32.mrb[0].mxu0
  %v2376 = vadd.f32 0.0, %v2375
  %v2377 = vpop.f32.mrb[0].mxu0
  %v2378 = vadd.f32 0.0, %v2377
  %2379 = vmatprep.mubr.bf16.mxu0 %v2083
  %2380 = vmatmul.mubr.bf16.gmra.mrb[0].mxu0 %v2082
  %v2381 = vpop.f32.mrb[0].mxu0
  %v2382 = vadd.f32 0.0, %v2381
  %v2383 = vpop.f32.mrb[0].mxu0
  %v2384 = vadd.f32 0.0, %v2383
  %v2385 = vpop.f32.mrb[0].mxu0
  %v2386 = vadd.f32 0.0, %v2385
  %v2387 = vpop.f32.mrb[0].mxu0
  %v2388 = vadd.f32 0.0, %v2387
  %2389 = vdwg.mxu0
  %v2390 = vxor.u32 %v2312, 2147483648
  %v2391 = vxor.u32 %v2316, 2147483648
  %v2392 = vxor.u32 %v2322, 2147483648
  %v2393 = vxor.u32 %v2326, 2147483648
  %v2394 = vxor.u32 %v2332, 2147483648
  %v2395 = vxor.u32 %v2336, 2147483648
  %v2396 = vxor.u32 %v2342, 2147483648
  %v2397 = vxor.u32 %v2346, 2147483648
  %v2398 = vxor.u32 %v2352, 2147483648
  %v2399 = vxor.u32 %v2356, 2147483648
  %v2400 = vxor.u32 %v2362, 2147483648
  %v2401 = vxor.u32 %v2366, 2147483648
  %v2402 = vxor.u32 %v2372, 2147483648
  %v2403 = vxor.u32 %v2376, 2147483648
  %v2404 = vxor.u32 %v2382, 2147483648
  %v2405 = vxor.u32 %v2386, 2147483648
  %v2406 = vmul.f32 %v2390, 1.442695
  %v2407 = vpow.pop %v2406
  %v2408 = vmul.f32 %v2391, 1.442695
  %v2409 = vpow.pop %v2408
  %v2410 = vmul.f32 %v2392, 1.442695
  %v2411 = vpow.pop %v2410
  %v2412 = vmul.f32 %v2393, 1.442695
  %v2413 = vpow.pop %v2412
  %v2414 = vmul.f32 %v2394, 1.442695
  %v2415 = vpow.pop %v2414
  %v2416 = vmul.f32 %v2395, 1.442695
  %v2417 = vpow.pop %v2416
  %v2418 = vmul.f32 %v2396, 1.442695
  %v2419 = vpow.pop %v2418
  %v2420 = vmul.f32 %v2397, 1.442695
  %v2421 = vpow.pop %v2420
  %v2422 = vmul.f32 %v2398, 1.442695
  %v2423 = vpow.pop %v2422
  %v2424 = vmul.f32 %v2399, 1.442695
  %v2425 = vpow.pop %v2424
  %v2426 = vmul.f32 %v2400, 1.442695
  %v2427 = vpow.pop %v2426
  %v2428 = vmul.f32 %v2401, 1.442695
  %v2429 = vpow.pop %v2428
  %v2430 = vmul.f32 %v2402, 1.442695
  %v2431 = vpow.pop %v2430
  %v2432 = vmul.f32 %v2403, 1.442695
  %v2433 = vpow.pop %v2432
  %v2434 = vmul.f32 %v2404, 1.442695
  %v2435 = vpow.pop %v2434
  %v2436 = vmul.f32 %v2405, 1.442695
  %v2437 = vpow.pop %v2436
  %v2438 = vadd.f32 %v2407, 1.0
  %v2439 = vadd.f32 %v2409, 1.0
  %v2440 = vadd.f32 %v2411, 1.0
  %v2441 = vadd.f32 %v2413, 1.0
  %v2442 = vadd.f32 %v2415, 1.0
  %v2443 = vadd.f32 %v2417, 1.0
  %v2444 = vadd.f32 %v2419, 1.0
  %v2445 = vadd.f32 %v2421, 1.0
  %v2446 = vadd.f32 %v2423, 1.0
  %v2447 = vadd.f32 %v2425, 1.0
  %v2448 = vadd.f32 %v2427, 1.0
  %v2449 = vadd.f32 %v2429, 1.0
  %v2450 = vadd.f32 %v2431, 1.0
  %v2451 = vadd.f32 %v2433, 1.0
  %v2452 = vadd.f32 %v2435, 1.0
  %v2453 = vadd.f32 %v2437, 1.0
  %v2454 = vrcp.pop %v2438
  %v2455 = vmul.f32 1.0, %v2454
  %v2456 = vrcp.pop %v2439
  %v2457 = vmul.f32 1.0, %v2456
  %v2458 = vrcp.pop %v2440
  %v2459 = vmul.f32 1.0, %v2458
  %v2460 = vrcp.pop %v2441
  %v2461 = vmul.f32 1.0, %v2460
  %v2462 = vrcp.pop %v2442
  %v2463 = vmul.f32 1.0, %v2462
  %v2464 = vrcp.pop %v2443
  %v2465 = vmul.f32 1.0, %v2464
  %v2466 = vrcp.pop %v2444
  %v2467 = vmul.f32 1.0, %v2466
  %v2468 = vrcp.pop %v2445
  %v2469 = vmul.f32 1.0, %v2468
  %v2470 = vrcp.pop %v2446
  %v2471 = vmul.f32 1.0, %v2470
  %v2472 = vrcp.pop %v2447
  %v2473 = vmul.f32 1.0, %v2472
  %v2474 = vrcp.pop %v2448
  %v2475 = vmul.f32 1.0, %v2474
  %v2476 = vrcp.pop %v2449
  %v2477 = vmul.f32 1.0, %v2476
  %v2478 = vrcp.pop %v2450
  %v2479 = vmul.f32 1.0, %v2478
  %v2480 = vrcp.pop %v2451
  %v2481 = vmul.f32 1.0, %v2480
  %v2482 = vrcp.pop %v2452
  %v2483 = vmul.f32 1.0, %v2482
  %v2484 = vrcp.pop %v2453
  %v2485 = vmul.f32 1.0, %v2484
  %v2486 = vmul.f32 %v2312, %v2455
  %v2487 = vmul.f32 %v2316, %v2457
  %v2488 = vmul.f32 %v2322, %v2459
  %v2489 = vmul.f32 %v2326, %v2461
  %v2490 = vmul.f32 %v2332, %v2463
  %v2491 = vmul.f32 %v2336, %v2465
  %v2492 = vmul.f32 %v2342, %v2467
  %v2493 = vmul.f32 %v2346, %v2469
  %v2494 = vmul.f32 %v2352, %v2471
  %v2495 = vmul.f32 %v2356, %v2473
  %v2496 = vmul.f32 %v2362, %v2475
  %v2497 = vmul.f32 %v2366, %v2477
  %v2498 = vmul.f32 %v2372, %v2479
  %v2499 = vmul.f32 %v2376, %v2481
  %v2500 = vmul.f32 %v2382, %v2483
  %v2501 = vmul.f32 %v2386, %v2485
  %v2502 = vmul.f32 %v2486, %v2314
  %v2503 = vmul.f32 %v2487, %v2318
  %v2504 = vmul.f32 %v2488, %v2324
  %v2505 = vmul.f32 %v2489, %v2328
  %v2506 = vmul.f32 %v2490, %v2334
  %v2507 = vmul.f32 %v2491, %v2338
  %v2508 = vmul.f32 %v2492, %v2344
  %v2509 = vmul.f32 %v2493, %v2348
  %v2510 = vmul.f32 %v2494, %v2354
  %v2511 = vmul.f32 %v2495, %v2358
  %v2512 = vmul.f32 %v2496, %v2364
  %v2513 = vmul.f32 %v2497, %v2368
  %v2514 = vmul.f32 %v2498, %v2374
  %v2515 = vmul.f32 %v2499, %v2378
  %v2516 = vmul.f32 %v2500, %v2384
  %v2517 = vmul.f32 %v2501, %v2388
  %v2518 = vpack.c.bf16 %v2503, %v2502
  %v2519 = vpack.c.bf16 %v2505, %v2504
  %v2520 = vpack.c.bf16 %v2507, %v2506
  %v2521 = vpack.c.bf16 %v2509, %v2508
  %v2522 = vpack.c.bf16 %v2511, %v2510
  %v2523 = vpack.c.bf16 %v2513, %v2512
  %v2524 = vpack.c.bf16 %v2515, %v2514
  %v2525 = vpack.c.bf16 %v2517, %v2516
  %s2526 = scalar_lea.vmem %s3, 256
  %v2527 = vld [vmem:[%s2526] sm:$0xff]
  %v2528 = vld [vmem:[%s2526 + $0x8] sm:$0xff]
  %v2529 = vld [vmem:[%s2526 + $0x10] sm:$0xff]
  %v2530 = vld [vmem:[%s2526 + $0x18] sm:$0xff]
  %v2531 = vld [vmem:[%s2526 + $0x20] sm:$0xff]
  %v2532 = vld [vmem:[%s2526 + $0x28] sm:$0xff]
  %v2533 = vld [vmem:[%s2526 + $0x30] sm:$0xff]
  %v2534 = vld [vmem:[%s2526 + $0x38] sm:$0xff]
  %v2535 = vld [vmem:[%s2526 + $0x40] sm:$0xff]
  %v2536 = vld [vmem:[%s2526 + $0x48] sm:$0xff]
  %v2537 = vld [vmem:[%s2526 + $0x50] sm:$0xff]
  %v2538 = vld [vmem:[%s2526 + $0x58] sm:$0xff]
  %v2539 = vld [vmem:[%s2526 + $0x60] sm:$0xff]
  %v2540 = vld [vmem:[%s2526 + $0x68] sm:$0xff]
  %v2541 = vld [vmem:[%s2526 + $0x70] sm:$0xff]
  %v2542 = vld [vmem:[%s2526 + $0x78] sm:$0xff]
  %v2559 = vunpack.c.l.b16 %v2527
  %v2560 = vunpack.c.h.b16 %v2527
  %v2561 = vunpack.c.l.b16 %v2528
  %v2562 = vunpack.c.h.b16 %v2528
  %v2563 = vunpack.c.l.b16 %v2529
  %v2564 = vunpack.c.h.b16 %v2529
  %v2565 = vunpack.c.l.b16 %v2530
  %v2566 = vunpack.c.h.b16 %v2530
  %v2567 = vunpack.c.l.b16 %v2531
  %v2568 = vunpack.c.h.b16 %v2531
  %v2569 = vunpack.c.l.b16 %v2532
  %v2570 = vunpack.c.h.b16 %v2532
  %v2571 = vunpack.c.l.b16 %v2533
  %v2572 = vunpack.c.h.b16 %v2533
  %v2573 = vunpack.c.l.b16 %v2534
  %v2574 = vunpack.c.h.b16 %v2534
  %v2575 = vunpack.c.l.b16 %v2535
  %v2576 = vunpack.c.h.b16 %v2535
  %v2577 = vunpack.c.l.b16 %v2536
  %v2578 = vunpack.c.h.b16 %v2536
  %v2579 = vunpack.c.l.b16 %v2537
  %v2580 = vunpack.c.h.b16 %v2537
  %v2581 = vunpack.c.l.b16 %v2538
  %v2582 = vunpack.c.h.b16 %v2538
  %v2583 = vunpack.c.l.b16 %v2539
  %v2584 = vunpack.c.h.b16 %v2539
  %v2585 = vunpack.c.l.b16 %v2540
  %v2586 = vunpack.c.h.b16 %v2540
  %v2587 = vunpack.c.l.b16 %v2541
  %v2588 = vunpack.c.h.b16 %v2541
  %v2589 = vunpack.c.l.b16 %v2542
  %v2590 = vunpack.c.h.b16 %v2542
  %v2591 = vpack.c.b16 %v2561, %v2559
  %v2592 = vpack.c.b16 %v2562, %v2560
  %v2593 = vpack.c.b16 %v2565, %v2563
  %v2594 = vpack.c.b16 %v2566, %v2564
  %v2595 = vpack.c.b16 %v2569, %v2567
  %v2596 = vpack.c.b16 %v2570, %v2568
  %v2597 = vpack.c.b16 %v2573, %v2571
  %v2598 = vpack.c.b16 %v2574, %v2572
  %v2599 = vpack.c.b16 %v2577, %v2575
  %v2600 = vpack.c.b16 %v2578, %v2576
  %v2601 = vpack.c.b16 %v2581, %v2579
  %v2602 = vpack.c.b16 %v2582, %v2580
  %v2603 = vpack.c.b16 %v2585, %v2583
  %v2604 = vpack.c.b16 %v2586, %v2584
  %v2605 = vpack.c.b16 %v2589, %v2587
  %v2606 = vpack.c.b16 %v2590, %v2588
  %2623 = vmatprep.subr.bf16.mxu0 %v2592
  %2624 = vmatpush1.bf16.msra.mxu0 %v2591
  %2625 = vmatprep.subr.bf16.mxu0 %v2594
  %2626 = vmatpush1.bf16.msra.mxu0 %v2593
  %2627 = vmatprep.subr.bf16.mxu0 %v2596
  %2628 = vmatpush1.bf16.msra.mxu0 %v2595
  %2629 = vmatprep.subr.bf16.mxu0 %v2598
  %2630 = vmatpush1.bf16.msra.mxu0 %v2597
  %2631 = vmatprep.subr.bf16.mxu0 %v2600
  %2632 = vmatpush1.bf16.msra.mxu0 %v2599
  %2633 = vmatprep.subr.bf16.mxu0 %v2602
  %2634 = vmatpush1.bf16.msra.mxu0 %v2601
  %2635 = vmatprep.subr.bf16.mxu0 %v2604
  %2636 = vmatpush1.bf16.msra.mxu0 %v2603
  %2637 = vmatprep.subr.bf16.mxu0 %v2606
  %2638 = vmatpush1.bf16.msra.mxu0 %v2605
  %2639 = vmatprep.subr.bf16.mxu0 0
  %2640 = vmatpush1.bf16.msra.mxu0 0
  %2641 = vmatprep.subr.bf16.mxu0 0
  %2642 = vmatpush1.bf16.msra.mxu0 0
  %2643 = vmatprep.subr.bf16.mxu0 0
  %2644 = vmatpush1.bf16.msra.mxu0 0
  %2645 = vmatprep.subr.bf16.mxu0 0
  %2646 = vmatpush1.bf16.msra.mxu0 0
  %2647 = vmatprep.subr.bf16.mxu0 0
  %2648 = vmatpush1.bf16.msra.mxu0 0
  %2649 = vmatprep.subr.bf16.mxu0 0
  %2650 = vmatpush1.bf16.msra.mxu0 0
  %2651 = vmatprep.subr.bf16.mxu0 0
  %2652 = vmatpush1.bf16.msra.mxu0 0
  %2653 = vmatprep.subr.bf16.mxu0 0
  %2654 = vmatpush1.bf16.msra.mxu0 0
  %2655 = vmatprep.mubr.bf16.mxu0 0
  %2656 = vmatmul.mubr.bf16.gmra.mrb[0].mxu0 %v2518
  %v2657 = vpop.f32.mrb[0].mxu0
  %v2658 = vadd.f32 0.0, %v2657
  %v2659 = vpop.f32.mrb[0].mxu0
  %v2660 = vadd.f32 0.0, %v2659
  %v2661 = vpop.f32.mrb[0].mxu0
  %v2662 = vadd.f32 0.0, %v2661
  %v2663 = vpop.f32.mrb[0].mxu0
  %v2664 = vadd.f32 0.0, %v2663
  %2665 = vmatprep.mubr.bf16.mxu0 0
  %2666 = vmatmul.mubr.bf16.gmra.mrb[0].mxu0 %v2519
  %v2667 = vpop.f32.mrb[0].mxu0
  %v2668 = vadd.f32 0.0, %v2667
  %v2669 = vpop.f32.mrb[0].mxu0
  %v2670 = vadd.f32 0.0, %v2669
  %v2671 = vpop.f32.mrb[0].mxu0
  %v2672 = vadd.f32 0.0, %v2671
  %v2673 = vpop.f32.mrb[0].mxu0
  %v2674 = vadd.f32 0.0, %v2673
  %2675 = vmatprep.mubr.bf16.mxu0 0
  %2676 = vmatmul.mubr.bf16.gmra.mrb[0].mxu0 %v2520
  %v2677 = vpop.f32.mrb[0].mxu0
  %v2678 = vadd.f32 0.0, %v2677
  %v2679 = vpop.f32.mrb[0].mxu0
  %v2680 = vadd.f32 0.0, %v2679
  %v2681 = vpop.f32.mrb[0].mxu0
  %v2682 = vadd.f32 0.0, %v2681
  %v2683 = vpop.f32.mrb[0].mxu0
  %v2684 = vadd.f32 0.0, %v2683
  %2685 = vmatprep.mubr.bf16.mxu0 0
  %2686 = vmatmul.mubr.bf16.gmra.mrb[0].mxu0 %v2521
  %v2687 = vpop.f32.mrb[0].mxu0
  %v2688 = vadd.f32 0.0, %v2687
  %v2689 = vpop.f32.mrb[0].mxu0
  %v2690 = vadd.f32 0.0, %v2689
  %v2691 = vpop.f32.mrb[0].mxu0
  %v2692 = vadd.f32 0.0, %v2691
  %v2693 = vpop.f32.mrb[0].mxu0
  %v2694 = vadd.f32 0.0, %v2693
  %2695 = vmatprep.mubr.bf16.mxu0 0
  %2696 = vmatmul.mubr.bf16.gmra.mrb[0].mxu0 %v2522
  %v2697 = vpop.f32.mrb[0].mxu0
  %v2698 = vadd.f32 0.0, %v2697
  %v2699 = vpop.f32.mrb[0].mxu0
  %v2700 = vadd.f32 0.0, %v2699
  %v2701 = vpop.f32.mrb[0].mxu0
  %v2702 = vadd.f32 0.0, %v2701
  %v2703 = vpop.f32.mrb[0].mxu0
  %v2704 = vadd.f32 0.0, %v2703
  %2705 = vmatprep.mubr.bf16.mxu0 0
  %2706 = vmatmul.mubr.bf16.gmra.mrb[0].mxu0 %v2523
  %v2707 = vpop.f32.mrb[0].mxu0
  %v2708 = vadd.f32 0.0, %v2707
  %v2709 = vpop.f32.mrb[0].mxu0
  %v2710 = vadd.f32 0.0, %v2709
  %v2711 = vpop.f32.mrb[0].mxu0
  %v2712 = vadd.f32 0.0, %v2711
  %v2713 = vpop.f32.mrb[0].mxu0
  %v2714 = vadd.f32 0.0, %v2713
  %2715 = vmatprep.mubr.bf16.mxu0 0
  %2716 = vmatmul.mubr.bf16.gmra.mrb[0].mxu0 %v2524
  %v2717 = vpop.f32.mrb[0].mxu0
  %v2718 = vadd.f32 0.0, %v2717
  %v2719 = vpop.f32.mrb[0].mxu0
  %v2720 = vadd.f32 0.0, %v2719
  %v2721 = vpop.f32.mrb[0].mxu0
  %v2722 = vadd.f32 0.0, %v2721
  %v2723 = vpop.f32.mrb[0].mxu0
  %v2724 = vadd.f32 0.0, %v2723
  %2725 = vmatprep.mubr.bf16.mxu0 0
  %2726 = vmatmul.mubr.bf16.gmra.mrb[0].mxu0 %v2525
  %v2727 = vpop.f32.mrb[0].mxu0
  %v2728 = vadd.f32 0.0, %v2727
  %v2729 = vpop.f32.mrb[0].mxu0
  %v2730 = vadd.f32 0.0, %v2729
  %v2731 = vpop.f32.mrb[0].mxu0
  %v2732 = vadd.f32 0.0, %v2731
  %v2733 = vpop.f32.mrb[0].mxu0
  %v2734 = vadd.f32 0.0, %v2733
  %2735 = vdwg.mxu0
  %v2736 = vadd.f32 %v1831, %v2658
  %v2737 = vadd.f32 %v1832, %v2660
  %v2738 = vadd.f32 %v1833, %v2662
  %v2739 = vadd.f32 %v1834, %v2664
  %v2740 = vadd.f32 %v1835, %v2668
  %v2741 = vadd.f32 %v1836, %v2670
  %v2742 = vadd.f32 %v1837, %v2672
  %v2743 = vadd.f32 %v1838, %v2674
  %v2744 = vadd.f32 %v1839, %v2678
  %v2745 = vadd.f32 %v1840, %v2680
  %v2746 = vadd.f32 %v1841, %v2682
  %v2747 = vadd.f32 %v1842, %v2684
  %v2748 = vadd.f32 %v1843, %v2688
  %v2749 = vadd.f32 %v1844, %v2690
  %v2750 = vadd.f32 %v1845, %v2692
  %v2751 = vadd.f32 %v1846, %v2694
  %v2752 = vadd.f32 %v1847, %v2698
  %v2753 = vadd.f32 %v1848, %v2700
  %v2754 = vadd.f32 %v1849, %v2702
  %v2755 = vadd.f32 %v1850, %v2704
  %v2756 = vadd.f32 %v1851, %v2708
  %v2757 = vadd.f32 %v1852, %v2710
  %v2758 = vadd.f32 %v1853, %v2712
  %v2759 = vadd.f32 %v1854, %v2714
  %v2760 = vadd.f32 %v1855, %v2718
  %v2761 = vadd.f32 %v1856, %v2720
  %v2762 = vadd.f32 %v1857, %v2722
  %v2763 = vadd.f32 %v1858, %v2724
  %v2764 = vadd.f32 %v1859, %v2728
  %v2765 = vadd.f32 %v1860, %v2730
  %v2766 = vadd.f32 %v1861, %v2732
  %v2767 = vadd.f32 %v1862, %v2734
  %v2768 = vpack.c.bf16 %v2738, %v2736
  %v2769 = vpack.c.bf16 %v2739, %v2737
  %v2770 = vpack.c.bf16 %v2742, %v2740
  %v2771 = vpack.c.bf16 %v2743, %v2741
  %v2772 = vpack.c.bf16 %v2746, %v2744
  %v2773 = vpack.c.bf16 %v2747, %v2745
  %v2774 = vpack.c.bf16 %v2750, %v2748
  %v2775 = vpack.c.bf16 %v2751, %v2749
  %v2776 = vpack.c.bf16 %v2754, %v2752
  %v2777 = vpack.c.bf16 %v2755, %v2753
  %v2778 = vpack.c.bf16 %v2758, %v2756
  %v2779 = vpack.c.bf16 %v2759, %v2757
  %v2780 = vpack.c.bf16 %v2762, %v2760
  %v2781 = vpack.c.bf16 %v2763, %v2761
  %v2782 = vpack.c.bf16 %v2766, %v2764
  %v2783 = vpack.c.bf16 %v2767, %v2765
  %v2784 = vld [vmem:[%s4] sm:$0xf]
  %v2785 = vld [vmem:[%s4 + $0x4] sm:$0xf]
  %v2786 = vld [vmem:[%s4 + $0x8] sm:$0xf]
  %v2787 = vld [vmem:[%s4 + $0xc] sm:$0xf]
  %v2788 = vld [vmem:[%s4 + $0x10] sm:$0xf]
  %v2789 = vld [vmem:[%s4 + $0x14] sm:$0xf]
  %v2790 = vld [vmem:[%s4 + $0x18] sm:$0xf]
  %v2791 = vld [vmem:[%s4 + $0x1c] sm:$0xf]
  %v2792 = vld [vmem:[%s4 + $0x20] sm:$0xf]
  %v2793 = vld [vmem:[%s4 + $0x24] sm:$0xf]
  %v2794 = vld [vmem:[%s4 + $0x28] sm:$0xf]
  %v2795 = vld [vmem:[%s4 + $0x2c] sm:$0xf]
  %v2796 = vld [vmem:[%s4 + $0x30] sm:$0xf]
  %v2797 = vld [vmem:[%s4 + $0x34] sm:$0xf]
  %v2798 = vld [vmem:[%s4 + $0x38] sm:$0xf]
  %v2799 = vld [vmem:[%s4 + $0x3c] sm:$0xf]
  %v2800 = vld [vmem:[%s4 + $0x40] sm:$0xf]
  %v2801 = vld [vmem:[%s4 + $0x44] sm:$0xf]
  %v2802 = vld [vmem:[%s4 + $0x48] sm:$0xf]
  %v2803 = vld [vmem:[%s4 + $0x4c] sm:$0xf]
  %v2804 = vld [vmem:[%s4 + $0x50] sm:$0xf]
  %v2805 = vld [vmem:[%s4 + $0x54] sm:$0xf]
  %v2806 = vld [vmem:[%s4 + $0x58] sm:$0xf]
  %v2807 = vld [vmem:[%s4 + $0x5c] sm:$0xf]
  %v2808 = vld [vmem:[%s4 + $0x60] sm:$0xf]
  %v2809 = vld [vmem:[%s4 + $0x64] sm:$0xf]
  %v2810 = vld [vmem:[%s4 + $0x68] sm:$0xf]
  %v2811 = vld [vmem:[%s4 + $0x6c] sm:$0xf]
  %v2812 = vld [vmem:[%s4 + $0x70] sm:$0xf]
  %v2813 = vld [vmem:[%s4 + $0x74] sm:$0xf]
  %v2814 = vld [vmem:[%s4 + $0x78] sm:$0xf]
  %v2815 = vld [vmem:[%s4 + $0x7c] sm:$0xf]
  %v2816 = vld [vmem:[%s5] sm:$0x1]
  %v2818 = vlaneseq
  %v2819 = vshrl.u32 %v2818, 7
  %v2820 = vsub.s32 0, %v2819
  %v2821 = vrot.slane %v2816, %v2820
  %v2855 = vunpack.c.l.b16 %v2784
  %v2856 = vunpack.c.l.b16 %v2785
  %v2857 = vunpack.c.l.b16 %v2786
  %v2858 = vunpack.c.l.b16 %v2787
  %v2859 = vunpack.c.l.b16 %v2788
  %v2860 = vunpack.c.l.b16 %v2789
  %v2861 = vunpack.c.l.b16 %v2790
  %v2862 = vunpack.c.l.b16 %v2791
  %v2863 = vunpack.c.l.b16 %v2792
  %v2864 = vunpack.c.l.b16 %v2793
  %v2865 = vunpack.c.l.b16 %v2794
  %v2866 = vunpack.c.l.b16 %v2795
  %v2867 = vunpack.c.l.b16 %v2796
  %v2868 = vunpack.c.l.b16 %v2797
  %v2869 = vunpack.c.l.b16 %v2798
  %v2870 = vunpack.c.l.b16 %v2799
  %v2871 = vunpack.c.l.b16 %v2800
  %v2872 = vunpack.c.l.b16 %v2801
  %v2873 = vunpack.c.l.b16 %v2802
  %v2874 = vunpack.c.l.b16 %v2803
  %v2875 = vunpack.c.l.b16 %v2804
  %v2876 = vunpack.c.l.b16 %v2805
  %v2877 = vunpack.c.l.b16 %v2806
  %v2878 = vunpack.c.l.b16 %v2807
  %v2879 = vunpack.c.l.b16 %v2808
  %v2880 = vunpack.c.l.b16 %v2809
  %v2881 = vunpack.c.l.b16 %v2810
  %v2882 = vunpack.c.l.b16 %v2811
  %v2883 = vunpack.c.l.b16 %v2812
  %v2884 = vunpack.c.l.b16 %v2813
  %v2885 = vunpack.c.l.b16 %v2814
  %v2886 = vunpack.c.l.b16 %v2815
  %v2887 = vpack.c.b16 %v2856, %v2855
  %v2888 = vpack.c.b16 %v2858, %v2857
  %v2889 = vpack.c.b16 %v2860, %v2859
  %v2890 = vpack.c.b16 %v2862, %v2861
  %v2891 = vpack.c.b16 %v2864, %v2863
  %v2892 = vpack.c.b16 %v2866, %v2865
  %v2893 = vpack.c.b16 %v2868, %v2867
  %v2894 = vpack.c.b16 %v2870, %v2869
  %v2895 = vpack.c.b16 %v2872, %v2871
  %v2896 = vpack.c.b16 %v2874, %v2873
  %v2897 = vpack.c.b16 %v2876, %v2875
  %v2898 = vpack.c.b16 %v2878, %v2877
  %v2899 = vpack.c.b16 %v2880, %v2879
  %v2900 = vpack.c.b16 %v2882, %v2881
  %v2901 = vpack.c.b16 %v2884, %v2883
  %v2902 = vpack.c.b16 %v2886, %v2885
  %2919 = vmatprep.subr.bf16.mxu0 0
  %2920 = vmatpush1.bf16.msra.mxu0 %v2887
  %2921 = vmatprep.subr.bf16.mxu0 0
  %2922 = vmatpush1.bf16.msra.mxu0 %v2888
  %2923 = vmatprep.subr.bf16.mxu0 0
  %2924 = vmatpush1.bf16.msra.mxu0 %v2889
  %2925 = vmatprep.subr.bf16.mxu0 0
  %2926 = vmatpush1.bf16.msra.mxu0 %v2890
  %2927 = vmatprep.subr.bf16.mxu0 0
  %2928 = vmatpush1.bf16.msra.mxu0 %v2891
  %2929 = vmatprep.subr.bf16.mxu0 0
  %2930 = vmatpush1.bf16.msra.mxu0 %v2892
  %2931 = vmatprep.subr.bf16.mxu0 0
  %2932 = vmatpush1.bf16.msra.mxu0 %v2893
  %2933 = vmatprep.subr.bf16.mxu0 0
  %2934 = vmatpush1.bf16.msra.mxu0 %v2894
  %2935 = vmatprep.subr.bf16.mxu0 0
  %2936 = vmatpush1.bf16.msra.mxu0 %v2895
  %2937 = vmatprep.subr.bf16.mxu0 0
  %2938 = vmatpush1.bf16.msra.mxu0 %v2896
  %2939 = vmatprep.subr.bf16.mxu0 0
  %2940 = vmatpush1.bf16.msra.mxu0 %v2897
  %2941 = vmatprep.subr.bf16.mxu0 0
  %2942 = vmatpush1.bf16.msra.mxu0 %v2898
  %2943 = vmatprep.subr.bf16.mxu0 0
  %2944 = vmatpush1.bf16.msra.mxu0 %v2899
  %2945 = vmatprep.subr.bf16.mxu0 0
  %2946 = vmatpush1.bf16.msra.mxu0 %v2900
  %2947 = vmatprep.subr.bf16.mxu0 0
  %2948 = vmatpush1.bf16.msra.mxu0 %v2901
  %2949 = vmatprep.subr.bf16.mxu0 0
  %2950 = vmatpush1.bf16.msra.mxu0 %v2902
  %2951 = vmatprep.mubr.bf16.mxu0 %v2769
  %2952 = vmatmul.mubr.bf16.gmra.mrb[0].mxu0 %v2768
  %v2953 = vpop.f32.mrb[0].mxu0
  %v2954 = vadd.f32 %v2821, %v2953
  %v2955 = vpop.f32.mrb[0].mxu0
  %v2956 = vpop.f32.mrb[0].mxu0
  %v2957 = vadd.f32 %v2821, %v2956
  %v2958 = vpop.f32.mrb[0].mxu0
  %2959 = vmatprep.mubr.bf16.mxu0 %v2771
  %2960 = vmatmul.mubr.bf16.gmra.mrb[0].mxu0 %v2770
  %v2961 = vpop.f32.mrb[0].mxu0
  %v2962 = vadd.f32 %v2821, %v2961
  %v2963 = vpop.f32.mrb[0].mxu0
  %v2964 = vpop.f32.mrb[0].mxu0
  %v2965 = vadd.f32 %v2821, %v2964
  %v2966 = vpop.f32.mrb[0].mxu0
  %2967 = vmatprep.mubr.bf16.mxu0 %v2773
  %2968 = vmatmul.mubr.bf16.gmra.mrb[0].mxu0 %v2772
  %v2969 = vpop.f32.mrb[0].mxu0
  %v2970 = vadd.f32 %v2821, %v2969
  %v2971 = vpop.f32.mrb[0].mxu0
  %v2972 = vpop.f32.mrb[0].mxu0
  %v2973 = vadd.f32 %v2821, %v2972
  %v2974 = vpop.f32.mrb[0].mxu0
  %2975 = vmatprep.mubr.bf16.mxu0 %v2775
  %2976 = vmatmul.mubr.bf16.gmra.mrb[0].mxu0 %v2774
  %v2977 = vpop.f32.mrb[0].mxu0
  %v2978 = vadd.f32 %v2821, %v2977
  %v2979 = vpop.f32.mrb[0].mxu0
  %v2980 = vpop.f32.mrb[0].mxu0
  %v2981 = vadd.f32 %v2821, %v2980
  %v2982 = vpop.f32.mrb[0].mxu0
  %2983 = vmatprep.mubr.bf16.mxu0 %v2777
  %2984 = vmatmul.mubr.bf16.gmra.mrb[0].mxu0 %v2776
  %v2985 = vpop.f32.mrb[0].mxu0
  %v2986 = vadd.f32 %v2821, %v2985
  %v2987 = vpop.f32.mrb[0].mxu0
  %v2988 = vpop.f32.mrb[0].mxu0
  %v2989 = vadd.f32 %v2821, %v2988
  %v2990 = vpop.f32.mrb[0].mxu0
  %2991 = vmatprep.mubr.bf16.mxu0 %v2779
  %2992 = vmatmul.mubr.bf16.gmra.mrb[0].mxu0 %v2778
  %v2993 = vpop.f32.mrb[0].mxu0
  %v2994 = vadd.f32 %v2821, %v2993
  %v2995 = vpop.f32.mrb[0].mxu0
  %v2996 = vpop.f32.mrb[0].mxu0
  %v2997 = vadd.f32 %v2821, %v2996
  %v2998 = vpop.f32.mrb[0].mxu0
  %2999 = vmatprep.mubr.bf16.mxu0 %v2781
  %3000 = vmatmul.mubr.bf16.gmra.mrb[0].mxu0 %v2780
  %v3001 = vpop.f32.mrb[0].mxu0
  %v3002 = vadd.f32 %v2821, %v3001
  %v3003 = vpop.f32.mrb[0].mxu0
  %v3004 = vpop.f32.mrb[0].mxu0
  %v3005 = vadd.f32 %v2821, %v3004
  %v3006 = vpop.f32.mrb[0].mxu0
  %3007 = vmatprep.mubr.bf16.mxu0 %v2783
  %3008 = vmatmul.mubr.bf16.gmra.mrb[0].mxu0 %v2782
  %v3009 = vpop.f32.mrb[0].mxu0
  %v3010 = vadd.f32 %v2821, %v3009
  %v3011 = vpop.f32.mrb[0].mxu0
  %v3012 = vpop.f32.mrb[0].mxu0
  %v3013 = vadd.f32 %v2821, %v3012
  %v3014 = vpop.f32.mrb[0].mxu0
  %3015 = vdwg.mxu0
  %3016 = vst [vmem:[%s6] sm:$0xff] %v2954
  %3017 = vst [vmem:[%s6 + $0x8] sm:$0xff] %v2957
  %3018 = vst [vmem:[%s6 + $0x10] sm:$0xff] %v2962
  %3019 = vst [vmem:[%s6 + $0x18] sm:$0xff] %v2965
  %3020 = vst [vmem:[%s6 + $0x20] sm:$0xff] %v2970
  %3021 = vst [vmem:[%s6 + $0x28] sm:$0xff] %v2973
  %3022 = vst [vmem:[%s6 + $0x30] sm:$0xff] %v2978
  %3023 = vst [vmem:[%s6 + $0x38] sm:$0xff] %v2981
  %3024 = vst [vmem:[%s6 + $0x40] sm:$0xff] %v2986
  %3025 = vst [vmem:[%s6 + $0x48] sm:$0xff] %v2989
  %3026 = vst [vmem:[%s6 + $0x50] sm:$0xff] %v2994
  %3027 = vst [vmem:[%s6 + $0x58] sm:$0xff] %v2997
  %3028 = vst [vmem:[%s6 + $0x60] sm:$0xff] %v3002
  %3029 = vst [vmem:[%s6 + $0x68] sm:$0xff] %v3005
  %3030 = vst [vmem:[%s6 + $0x70] sm:$0xff] %v3010
  %3031 = vst [vmem:[%s6 + $0x78] sm:$0xff] %v3013
  // Predicated region
  $region26: #{_lambda_.1} parent=0 // pred_check
    _
  $region27: #{_lambda_.1} parent=0 // pred_check_branch
    %3033 = sbr.rel (0) target = $region29
  $region28: #{_lambda_.1} parent=0 // pred_region
    _
  $region29: #{_lambda_.1} parent=0 // pred_fallthru
    _
  // Predicated region
  $region30: #{_lambda_.1} parent=0 // pred_check
    _
  $region31: #{_lambda_.1} parent=0 // pred_check_branch
    %3035 = sbr.rel (0) target = $region33
  $region32: #{_lambda_.1} parent=0 // pred_region
    _
  $region33: #{_lambda_.1} parent=0 // pred_fallthru
    _

</llo_original>
